<compile_context>
chip_gen: v7x
topology: tpu7x:2x2x1
jax: 0.10.0
libtpu: 0.0.40
codegen_flags: <defaults>
</compile_context>

<pallas_src>
import functools

import jax
import jax.numpy as jnp
from jax import lax
from jax.experimental import pallas as pl
from jax.experimental.pallas import tpu as pltpu


LANE = 128          # class-dim padding target (vreg lane width)
MAX_TILE_B = 1024   # upper bound on the batch tile (lane axis of the outputs)


def _round_up(n, m):
    return ((n + m - 1) // m) * m


def _choose_tile_b(batch):
    """Largest batch tile that amortizes the ~0.35us/step grid overhead while
    keeping >=4 tiles so v7x's 2 TensorCores both get work on the parallel
    axis; tiny passes are covered by a single tile."""
    bp128 = _round_up(max(batch, 1), LANE)
    for tb in (MAX_TILE_B, 512, 256, LANE):
        if bp128 >= 4 * tb:
            return tb
    return min(bp128, 512)


def _fwd_loss_kernel(x_ref, wt_ref, b_ref, y_ref, nll_ref, pred_ref):
    # model.forward: logits_t[c, b] = sum_d W[d, c] * x[b, d] + bias[c]
    # x arrives in its natural (TILE_B, D) layout; cast to bf16 in-kernel and
    # contract both operands on their last (D) axis so the result is
    # (Cp, TILE_B): per-sample reductions land on the lane axis and outputs
    # are unmasked, lane-dense (1, TILE_B) stores.
    x_bf = x_ref[...].astype(jnp.bfloat16)                      # (TB, D)
    logits = lax.dot_general(
        wt_ref[...], x_bf,
        dimension_numbers=(((1,), (1,)), ((), ())),
        preferred_element_type=jnp.float32)                     # (Cp, TB) f32
    logits = logits + b_ref[...]                                # bias (Cp, 1)
    cp, tb = logits.shape

    labels = y_ref[...]                                         # (1, TB) int32
    row = lax.broadcasted_iota(jnp.int32, (cp, tb), 0)          # class index

    # CrossEntropyLoss per-sample NLL, numerically stable (class axis = 0).
    # Keep the whole epilogue in f32 (no bf16 VPU/EUP on v5e; the -1e30
    # padded-class bias also relies on f32 range).
    m = jnp.max(logits, axis=0, keepdims=True)                               # (1, TB)
    lse = m + jnp.log(jnp.sum(jnp.exp(logits - m), axis=0, keepdims=True))   # (1, TB)
    true_logit = jnp.sum(jnp.where(row == labels, logits, 0.0),
                         axis=0, keepdims=True)
    nll_ref[...] = lse - true_logit                                          # (1, TB)

    # torch.argmax(y_pred, axis=1): first max index (PyTorch tie rule).
    is_max = logits == m
    pred_ref[...] = jnp.min(jnp.where(is_max, row, cp), axis=0, keepdims=True)


def _vmem_limit_bytes(tile_b, d, cp, single_buffer_consts):
    wbuf = 1 if single_buffer_consts else 2
    need = (2 * tile_b * d * 4          # x tile, double buffered, f32
            + wbuf * cp * d * 2         # W^T bf16 (resident)
            + wbuf * cp * 4             # bias f32 (resident)
            + 2 * tile_b * 4            # labels
            + 2 * 2 * tile_b * 4        # two (1, TILE_B) outputs
            + 4 * cp * tile_b * 4)      # f32 logits / exp / iota temps
    return int(min(max(4 * need + (4 << 20), 16 << 20), 48 << 20))


def forward_nll_preds(x, w, b, y, *, single_buffer_consts=True):
    """Fused classifier forward + per-sample CE NLL + argmax predictions.

    x: [B, D] float   w: [D, C] float   b: [C] float   y: [B] int
    returns (nll [B] f32, preds [B] int32)
    """
    B, D = x.shape
    C = w.shape[1]
    cp = _round_up(C, LANE)
    tile_b = _choose_tile_b(B)
    bp = _round_up(B, tile_b)
    nt = bp // tile_b

    # No wrapper-side transposed bf16 copy of x: read it in its natural [B, D]
    # layout; pad the batch dim only when strictly needed.
    if bp != B:
        x = jnp.pad(x, ((0, bp - B), (0, 0)))
        y = jnp.pad(y, ((0, bp - B),))
    y2 = y.astype(jnp.int32).reshape(1, bp)

    # Tiny weight/bias plumbing: W^T in bf16, padded class rows masked with a
    # large-negative bias (safe only because the epilogue stays f32).
    w_t = jnp.zeros((cp, D), jnp.bfloat16).at[:C, :].set(
        w.astype(jnp.bfloat16).T)
    bias = jnp.full((cp, 1), -1e30, jnp.float32).at[:C, 0].set(
        b.astype(jnp.float32))

    def _const_spec(shape):
        # W^T / bias never change across the grid: single-buffer to save VMEM
        # (most valuable on v7x's 64 MiB).
        if single_buffer_consts:
            return pl.BlockSpec(shape, lambda i: (0, 0),
                                pipeline_mode=pl.Buffered(1))
        return pl.BlockSpec(shape, lambda i: (0, 0))

    x_bytes = int(x.dtype.itemsize)

    nll, preds = pl.pallas_call(
        _fwd_loss_kernel,
        out_shape=(
            jax.ShapeDtypeStruct((1, bp), jnp.float32),   # per-sample NLL
            jax.ShapeDtypeStruct((1, bp), jnp.int32),     # argmax predictions
        ),
        grid_spec=pltpu.PrefetchScalarGridSpec(
            num_scalar_prefetch=0,
            grid=(nt,),
            in_specs=[
                pl.BlockSpec((tile_b, D), lambda i: (i, 0)),   # x batch tile
                _const_spec((cp, D)),                          # W^T (resident)
                _const_spec((cp, 1)),                          # bias (resident)
                pl.BlockSpec((1, tile_b), lambda i: (0, i)),   # labels tile
            ],
            out_specs=[
                pl.BlockSpec((1, tile_b), lambda i: (0, i)),   # lane-dense NLL
                pl.BlockSpec((1, tile_b), lambda i: (0, i)),   # lane-dense preds
            ],
        ),
        compiler_params=pltpu.CompilerParams(
            dimension_semantics=("parallel",),   # v7x: shard tiles over 2 TCs
            vmem_limit_bytes=_vmem_limit_bytes(tile_b, D, cp,
                                               single_buffer_consts),
        ),
        cost_estimate=pl.CostEstimate(
            flops=2 * bp * D * cp,
            transcendentals=bp * cp,
            bytes_accessed=(bp * D * x_bytes + cp * D * 2 + cp * 4
                            + bp * 4 + 2 * bp * 4),
        ),
    )(x, w_t, bias, y2)

    # Only the first B lanes are valid; padded columns carry garbage and must
    # never be reduced over.
    return nll[0, :B], preds[0, :B]


def make_run_pass(single_buffer_consts=True):
    @jax.jit
    def run_pass(xs, ys, w, b):
        """One full dataloader pass: all batches in a single pallas_call grid."""
        nb, bs, d = xs.shape
        nll, preds = forward_nll_preds(
            xs.reshape(nb * bs, d), w, b, ys.reshape(nb * bs),
            single_buffer_consts=single_buffer_consts)
        per_batch_loss = nll.reshape(nb, bs).mean(axis=1)   # CE mean per batch
        return per_batch_loss, preds.reshape(nb, bs)
    return run_pass


if __name__ == "__main__":
    key = jax.random.PRNGKey(0)
    B, D, C = 64, 32, 10          # batch, feature dim, n_classes
    n_epochs, n_batches = 2, 4

    # Deterministic "model" parameters (linear classifier implied by Trainer).
    kw, kb, kx, ky = jax.random.split(key, 4)
    W = jax.random.normal(kw, (D, C), jnp.float32) * 0.1
    bias_vec = jax.random.normal(kb, (C,), jnp.float32) * 0.1

    # Deterministic synthetic "dataloaders".
    xs = jax.random.normal(kx, (n_batches, B, D), jnp.float32)
    ys = jax.random.randint(ky, (n_batches, B), 0, C, jnp.int32)

    # Prefer single-buffered resident W/bias; fall back to the default
    # double-buffered specs if this jax version rejects pl.Buffered(1).
    sbc = True
    run_pass = make_run_pass(single_buffer_consts=sbc)
    try:
        jax.block_until_ready(run_pass(xs, ys, W, bias_vec))
    except Exception:
        sbc = False
        run_pass = make_run_pass(single_buffer_consts=sbc)
        jax.block_until_ready(run_pass(xs, ys, W, bias_vec))

    # Host-side replica of Trainer.forward's bookkeeping.
    loss_history = {"train": [], "validation": [], "val_accuracy": []}
    params_vec = jnp.concatenate([W.ravel(), bias_vec.ravel()])

    last = None
    for epoch in range(n_epochs):
        ps_before = params_vec
        # --- training pass (forward + loss only) ---
        # TODO(synk): optimizer.zero_grad / loss.backward / optimizer.step,
        # scheduler.step, early stopping, checkpoint saving, f1_score and
        # wandb/tensorboard logging are host-side training machinery with no
        # Pallas equivalent.
        train_losses, _ = run_pass(xs, ys, W, bias_vec)
        loss_history["train"].extend(float(l) for l in train_losses)

        ps_after = params_vec                        # no optimizer step here
        ps_norm = float(jnp.linalg.norm(ps_before - ps_after))

        # --- validation pass: loss, argmax predictions, accuracy ---
        val_losses, preds = run_pass(xs, ys, W, bias_vec)
        last = (val_losses, preds)
        loss_history["validation"].append(float(val_losses.mean()))
        loss_history["val_accuracy"].append(float((preds == ys).mean()))

    jax.block_until_ready(last)

    # --- cross-check the kernel against pure-JAX references ---
    x_flat = xs.reshape(-1, D)
    y_flat = ys.reshape(-1)
    fwd = jax.jit(functools.partial(forward_nll_preds, single_buffer_consts=sbc))
    nll_k, preds_k = fwd(x_flat, W, bias_vec, y_flat)

    # Reference using the same bf16 operands / f32 accumulation as the kernel.
    logits_bf = jnp.dot(x_flat.astype(jnp.bfloat16), W.astype(jnp.bfloat16),
                        preferred_element_type=jnp.float32) + bias_vec
    nll_ref = (jax.nn.logsumexp(logits_bf, axis=-1)
               - jnp.take_along_axis(logits_bf, y_flat[:, None], axis=-1)[:, 0])
    assert jnp.allclose(nll_k, nll_ref, atol=1e-3, rtol=1e-3)
    srt = jnp.sort(logits_bf, axis=-1)
    near_tie = (srt[:, -1] - srt[:, -2]) < 1e-4
    assert jnp.all((preds_k == jnp.argmax(logits_bf, axis=-1)) | near_tie)

    # Semantic check vs the full-f32 torch-style CE (loose tol for bf16 inputs).
    logits_f32 = x_flat @ W + bias_vec
    ce_f32 = jnp.mean(jax.nn.logsumexp(logits_f32, axis=-1)
                      - jnp.take_along_axis(logits_f32, y_flat[:, None],
                                            axis=-1)[:, 0])
    assert jnp.allclose(jnp.mean(nll_k), ce_f32, atol=5e-2, rtol=5e-2)

    print("KERNEL_OK")
</pallas_src>

<mosaic_0001>
module attributes {stable_mosaic.version = 11 : i64} {
  func.func @_fwd_loss_kernel(%arg0: i32, %arg1: memref<256x32xf32, #tpu.memory_space<vmem>>, %arg2: memref<128x32xbf16, #tpu.memory_space<vmem>>, %arg3: memref<128x1xf32, #tpu.memory_space<vmem>>, %arg4: memref<1x256xi32, #tpu.memory_space<vmem>>, %arg5: memref<1x256xf32, #tpu.memory_space<vmem>>, %arg6: memref<1x256xi32, #tpu.memory_space<vmem>>) attributes {dimension_semantics = [#tpu.dimension_semantics<parallel>], iteration_bounds = array<i64: 1>, scalar_prefetch = 0 : i64, scratch_operands = 0 : i64, tpu.core_type = #tpu.core_type<tc>, window_params = [{transform_indices = @transform_0, window_bounds = array<i64: 256, 32>}, {pipeline_mode = #tpu.pipeline_mode<synchronous>, transform_indices = @transform_1, window_bounds = array<i64: 128, 32>}, {pipeline_mode = #tpu.pipeline_mode<synchronous>, transform_indices = @transform_2, window_bounds = array<i64: 128, 1>}, {transform_indices = @transform_3, window_bounds = array<i64: 1, 256>}, {transform_indices = @transform_4, window_bounds = array<i64: 1, 256>}, {transform_indices = @transform_5, window_bounds = array<i64: 1, 256>}]} {
    %c0 = arith.constant 0 : index
    %c0_0 = arith.constant 0 : index
    %0 = vector.load %arg1[%c0, %c0_0] : memref<256x32xf32, #tpu.memory_space<vmem>>, vector<256x32xf32>
    %1 = arith.truncf %0 : vector<256x32xf32> to vector<256x32xbf16>
    %c0_1 = arith.constant 0 : index
    %c0_2 = arith.constant 0 : index
    %2 = vector.load %arg2[%c0_1, %c0_2] : memref<128x32xbf16, #tpu.memory_space<vmem>>, vector<128x32xbf16>
    %cst = arith.constant dense<0.000000e+00> : vector<128x256xf32>
    %3 = tpu.matmul %2, %1, %cst {dimension_numbers = #tpu.dot_dimension_numbers<[1], [1], [0], [0], [0, 0, 1, 0], [], []>} : vector<128x32xbf16>, vector<256x32xbf16>, vector<128x256xf32> -> vector<128x256xf32>
    %c0_3 = arith.constant 0 : index
    %c0_4 = arith.constant 0 : index
    %4 = vector.load %arg3[%c0_3, %c0_4] : memref<128x1xf32, #tpu.memory_space<vmem>>, vector<128x1xf32>
    %5 = vector.broadcast %4 : vector<128x1xf32> to vector<128x256xf32>
    %6 = arith.addf %3, %5 : vector<128x256xf32>
    %c0_5 = arith.constant 0 : index
    %c0_6 = arith.constant 0 : index
    %7 = vector.load %arg4[%c0_5, %c0_6] : memref<1x256xi32, #tpu.memory_space<vmem>>, vector<1x256xi32>
    %8 = tpu.iota {dimensions = array<i32: 0>} : vector<128x256xi32>
    %cst_7 = arith.constant dense<0xFF800000> : vector<256xf32>
    %9 = vector.multi_reduction <maximumf>, %6, %cst_7 [0] : vector<128x256xf32> to vector<256xf32>
    %10 = vector.shape_cast %9 : vector<256xf32> to vector<1x256xf32>
    %11 = vector.broadcast %10 : vector<1x256xf32> to vector<128x256xf32>
    %12 = arith.subf %6, %11 : vector<128x256xf32>
    %13 = math.exp %12 : vector<128x256xf32>
    %cst_8 = arith.constant dense<0.000000e+00> : vector<256xf32>
    %14 = vector.multi_reduction <add>, %13, %cst_8 [0] : vector<128x256xf32> to vector<256xf32>
    %15 = vector.shape_cast %14 : vector<256xf32> to vector<1x256xf32>
    %16 = math.log %15 : vector<1x256xf32>
    %17 = arith.addf %10, %16 : vector<1x256xf32>
    %18 = vector.broadcast %7 : vector<1x256xi32> to vector<128x256xi32>
    %19 = arith.cmpi eq, %8, %18 : vector<128x256xi32>
    %cst_9 = arith.constant 0.000000e+00 : f32
    %20 = vector.broadcast %cst_9 : f32 to vector<128x256xf32>
    %21 = arith.select %19, %6, %20 : vector<128x256xi1>, vector<128x256xf32>
    %cst_10 = arith.constant dense<0.000000e+00> : vector<256xf32>
    %22 = vector.multi_reduction <add>, %21, %cst_10 [0] : vector<128x256xf32> to vector<256xf32>
    %23 = vector.shape_cast %22 : vector<256xf32> to vector<1x256xf32>
    %24 = arith.subf %17, %23 : vector<1x256xf32>
    %c0_11 = arith.constant 0 : index
    %c0_12 = arith.constant 0 : index
    %25 = vector.load %arg5[%c0_11, %c0_12] : memref<1x256xf32, #tpu.memory_space<vmem>>, vector<1x256xf32>
    tpu.vector_store %arg5[%c0_11, %c0_12], %24 {strides = array<i32>} : memref<1x256xf32, #tpu.memory_space<vmem>>, vector<1x256xf32>,
    %26 = vector.broadcast %10 : vector<1x256xf32> to vector<128x256xf32>
    %27 = arith.cmpf oeq, %6, %26 : vector<128x256xf32>
    %c128_i32 = arith.constant 128 : i32
    %28 = vector.broadcast %c128_i32 : i32 to vector<128x256xi32>
    %29 = arith.select %27, %8, %28 : vector<128x256xi1>, vector<128x256xi32>
    %cst_13 = arith.constant dense<2147483647> : vector<256xi32>
    %30 = vector.multi_reduction <minsi>, %29, %cst_13 [0] : vector<128x256xi32> to vector<256xi32>
    %31 = vector.shape_cast %30 : vector<256xi32> to vector<1x256xi32>
    %c0_14 = arith.constant 0 : index
    %c0_15 = arith.constant 0 : index
    %32 = vector.load %arg6[%c0_14, %c0_15] : memref<1x256xi32, #tpu.memory_space<vmem>>, vector<1x256xi32>
    tpu.vector_store %arg6[%c0_14, %c0_15], %31 {strides = array<i32>} : memref<1x256xi32, #tpu.memory_space<vmem>>, vector<1x256xi32>,
    return
  }
  func.func @transform_0(%arg0: i32) -> (i32, i32) {
    %c0_i32 = arith.constant 0 : i32
    %c0_i32_0 = arith.constant 0 : i32
    return %arg0, %c0_i32 : i32, i32
  }
  func.func @transform_1(%arg0: i32) -> (i32, i32) {
    %c0_i32 = arith.constant 0 : i32
    %c0_i32_0 = arith.constant 0 : i32
    %c0_i32_1 = arith.constant 0 : i32
    return %c0_i32, %c0_i32_0 : i32, i32
  }
  func.func @transform_2(%arg0: i32) -> (i32, i32) {
    %c0_i32 = arith.constant 0 : i32
    %c0_i32_0 = arith.constant 0 : i32
    %c0_i32_1 = arith.constant 0 : i32
    return %c0_i32, %c0_i32_0 : i32, i32
  }
  func.func @transform_3(%arg0: i32) -> (i32, i32) {
    %c0_i32 = arith.constant 0 : i32
    %c0_i32_0 = arith.constant 0 : i32
    return %c0_i32, %arg0 : i32, i32
  }
  func.func @transform_4(%arg0: i32) -> (i32, i32) {
    %c0_i32 = arith.constant 0 : i32
    %c0_i32_0 = arith.constant 0 : i32
    return %c0_i32, %arg0 : i32, i32
  }
  func.func @transform_5(%arg0: i32) -> (i32, i32) {
    %c0_i32 = arith.constant 0 : i32
    %c0_i32_0 = arith.constant 0 : i32
    return %c0_i32, %arg0 : i32, i32
  }
}

module attributes {stable_mosaic.version = 11 : i64} {
  func.func @_fwd_loss_kernel(%arg0: i32, %arg1: memref<256x32xf32, #tpu.memory_space<vmem>>, %arg2: memref<128x32xbf16, #tpu.memory_space<vmem>>, %arg3: memref<128x1xf32, #tpu.memory_space<vmem>>, %arg4: memref<1x256xi32, #tpu.memory_space<vmem>>, %arg5: memref<1x256xf32, #tpu.memory_space<vmem>>, %arg6: memref<1x256xi32, #tpu.memory_space<vmem>>) attributes {dimension_semantics = [#tpu.dimension_semantics<parallel>], iteration_bounds = array<i64: 1>, scalar_prefetch = 0 : i64, scratch_operands = 0 : i64, tpu.core_type = #tpu.core_type<tc>, window_params = [{transform_indices = @transform_0, window_bounds = array<i64: 256, 32>}, {pipeline_mode = #tpu.pipeline_mode<synchronous>, transform_indices = @transform_1, window_bounds = array<i64: 128, 32>}, {pipeline_mode = #tpu.pipeline_mode<synchronous>, transform_indices = @transform_2, window_bounds = array<i64: 128, 1>}, {transform_indices = @transform_3, window_bounds = array<i64: 1, 256>}, {transform_indices = @transform_4, window_bounds = array<i64: 1, 256>}, {transform_indices = @transform_5, window_bounds = array<i64: 1, 256>}]} {
    %c0 = arith.constant 0 : index
    %c0_0 = arith.constant 0 : index
    %0 = vector.load %arg1[%c0, %c0_0] : memref<256x32xf32, #tpu.memory_space<vmem>>, vector<256x32xf32>
    %1 = arith.truncf %0 : vector<256x32xf32> to vector<256x32xbf16>
    %c0_1 = arith.constant 0 : index
    %c0_2 = arith.constant 0 : index
    %2 = vector.load %arg2[%c0_1, %c0_2] : memref<128x32xbf16, #tpu.memory_space<vmem>>, vector<128x32xbf16>
    %cst = arith.constant dense<0.000000e+00> : vector<128x256xf32>
    %3 = tpu.matmul %2, %1, %cst {dimension_numbers = #tpu.dot_dimension_numbers<[1], [1], [0], [0], [0, 0, 1, 0], [], []>} : vector<128x32xbf16>, vector<256x32xbf16>, vector<128x256xf32> -> vector<128x256xf32>
    %c0_3 = arith.constant 0 : index
    %c0_4 = arith.constant 0 : index
    %4 = vector.load %arg3[%c0_3, %c0_4] : memref<128x1xf32, #tpu.memory_space<vmem>>, vector<128x1xf32>
    %5 = vector.broadcast %4 : vector<128x1xf32> to vector<128x256xf32>
    %6 = arith.addf %3, %5 : vector<128x256xf32>
    %c0_5 = arith.constant 0 : index
    %c0_6 = arith.constant 0 : index
    %7 = vector.load %arg4[%c0_5, %c0_6] : memref<1x256xi32, #tpu.memory_space<vmem>>, vector<1x256xi32>
    %8 = tpu.iota {dimensions = array<i32: 0>} : vector<128x256xi32>
    %cst_7 = arith.constant dense<0xFF800000> : vector<256xf32>
    %9 = vector.multi_reduction <maximumf>, %6, %cst_7 [0] : vector<128x256xf32> to vector<256xf32>
    %10 = vector.shape_cast %9 : vector<256xf32> to vector<1x256xf32>
    %11 = vector.broadcast %10 : vector<1x256xf32> to vector<128x256xf32>
    %12 = arith.subf %6, %11 : vector<128x256xf32>
    %13 = math.exp %12 : vector<128x256xf32>
    %cst_8 = arith.constant dense<0.000000e+00> : vector<256xf32>
    %14 = vector.multi_reduction <add>, %13, %cst_8 [0] : vector<128x256xf32> to vector<256xf32>
    %15 = vector.shape_cast %14 : vector<256xf32> to vector<1x256xf32>
    %16 = math.log %15 : vector<1x256xf32>
    %17 = arith.addf %10, %16 : vector<1x256xf32>
    %18 = vector.broadcast %7 : vector<1x256xi32> to vector<128x256xi32>
    %19 = arith.cmpi eq, %8, %18 : vector<128x256xi32>
    %cst_9 = arith.constant 0.000000e+00 : f32
    %20 = vector.broadcast %cst_9 : f32 to vector<128x256xf32>
    %21 = arith.select %19, %6, %20 : vector<128x256xi1>, vector<128x256xf32>
    %cst_10 = arith.constant dense<0.000000e+00> : vector<256xf32>
    %22 = vector.multi_reduction <add>, %21, %cst_10 [0] : vector<128x256xf32> to vector<256xf32>
    %23 = vector.shape_cast %22 : vector<256xf32> to vector<1x256xf32>
    %24 = arith.subf %17, %23 : vector<1x256xf32>
    %c0_11 = arith.constant 0 : index
    %c0_12 = arith.constant 0 : index
    %25 = vector.load %arg5[%c0_11, %c0_12] : memref<1x256xf32, #tpu.memory_space<vmem>>, vector<1x256xf32>
    tpu.vector_store %arg5[%c0_11, %c0_12], %24 {strides = array<i32>} : memref<1x256xf32, #tpu.memory_space<vmem>>, vector<1x256xf32>,
    %26 = vector.broadcast %10 : vector<1x256xf32> to vector<128x256xf32>
    %27 = arith.cmpf oeq, %6, %26 : vector<128x256xf32>
    %c128_i32 = arith.constant 128 : i32
    %28 = vector.broadcast %c128_i32 : i32 to vector<128x256xi32>
    %29 = arith.select %27, %8, %28 : vector<128x256xi1>, vector<128x256xi32>
    %cst_13 = arith.constant dense<2147483647> : vector<256xi32>
    %30 = vector.multi_reduction <minsi>, %29, %cst_13 [0] : vector<128x256xi32> to vector<256xi32>
    %31 = vector.shape_cast %30 : vector<256xi32> to vector<1x256xi32>
    %c0_14 = arith.constant 0 : index
    %c0_15 = arith.constant 0 : index
    %32 = vector.load %arg6[%c0_14, %c0_15] : memref<1x256xi32, #tpu.memory_space<vmem>>, vector<1x256xi32>
    tpu.vector_store %arg6[%c0_14, %c0_15], %31 {strides = array<i32>} : memref<1x256xi32, #tpu.memory_space<vmem>>, vector<1x256xi32>,
    return
  }
  func.func @transform_0(%arg0: i32) -> (i32, i32) {
    %c0_i32 = arith.constant 0 : i32
    %c0_i32_0 = arith.constant 0 : i32
    return %arg0, %c0_i32 : i32, i32
  }
  func.func @transform_1(%arg0: i32) -> (i32, i32) {
    %c0_i32 = arith.constant 0 : i32
    %c0_i32_0 = arith.constant 0 : i32
    %c0_i32_1 = arith.constant 0 : i32
    return %c0_i32, %c0_i32_0 : i32, i32
  }
  func.func @transform_2(%arg0: i32) -> (i32, i32) {
    %c0_i32 = arith.constant 0 : i32
    %c0_i32_0 = arith.constant 0 : i32
    %c0_i32_1 = arith.constant 0 : i32
    return %c0_i32, %c0_i32_0 : i32, i32
  }
  func.func @transform_3(%arg0: i32) -> (i32, i32) {
    %c0_i32 = arith.constant 0 : i32
    %c0_i32_0 = arith.constant 0 : i32
    return %c0_i32, %arg0 : i32, i32
  }
  func.func @transform_4(%arg0: i32) -> (i32, i32) {
    %c0_i32 = arith.constant 0 : i32
    %c0_i32_0 = arith.constant 0 : i32
    return %c0_i32, %arg0 : i32, i32
  }
  func.func @transform_5(%arg0: i32) -> (i32, i32) {
    %c0_i32 = arith.constant 0 : i32
    %c0_i32_0 = arith.constant 0 : i32
    return %c0_i32, %arg0 : i32, i32
  }
}

</mosaic_0001>

<llo_original>
// kernel: squeeze.2
$region0: #{squeeze.2}
  %s0 = inlined_call_operand.vmem [shape: f32[256], index: 0, kind: input, shape index: {}]
  %s1 = inlined_call_operand.vmem [shape: f32[4,64], index: 1, kind: output, shape index: {}]
  $region1: #{squeeze.2} parent=0
    #allocation0 [shape = 'u8[4096]{0}', space=vmem, size = 0x1000, scoped, tag = 'scoped mem for output reshape']
    #allocation1 [shape = 'u8[4096]{0}', space=vmem, size = 0x1000, scoped, tag = 'scoped mem for input reshape']
    %s3 = sshllo.u32 0, 2
    %v4 = vld [vmem:[%s0] sm:%s3]
    %5 = vst [vmem:[#allocation1] sm:%s3] %v4
    %v6 = vld [vmem:[#allocation1] sm:$0x3]
    %vm7 = vcmask 523264
    %8 = vst.msk [vmem:[#allocation0] ss:$2 sm:$0x3] %vm7, %v6
    %v9 = vld [vmem:[#allocation1] sm:$0x3]
    %10 = vrot.lane.b32.xlu0 %v9, 64
    %v11 = vpop.permute.xlu0 %10
    %vm12 = vcmask 523264
    %s13 = scalar_lea.vmem [#allocation0], 1
    %14 = vst.msk [vmem:[%s13] ss:$2 sm:$0x3] %vm12, %v11
    %s16 = sshllo.u32 0, 4
    %v18 = vld [vmem:[#allocation0] sm:%s16]
    %s19 = sshllo.u32 0, 4
    %20 = vst [vmem:[%s1] sm:%s19] %v18

// kernel: squeeze.3
$region0: #{squeeze.3}
  %s0 = inlined_call_operand.vmem [shape: s32[256], index: 0, kind: input, shape index: {}]
  %s1 = inlined_call_operand.hbm [shape: s32[4,64], index: 1, kind: output, shape index: {}]
  $region1: #{squeeze.3} parent=0
    #allocation0 [shape = 'u8[2048]{0}', space=vmem, size = 0x800, scoped, tag = 'operand span for operand 1']
    #allocation1 [shape = 's32[1]{0}', space=sflag, size = 0x4, scoped, tag = 'scoped memory for squeeze.3']
    #allocation2 [shape = 'u8[4096]{0}', space=vmem, size = 0x1000, scoped, tag = 'scoped mem for output reshape']
    #allocation3 [shape = 'u8[4096]{0}', space=vmem, size = 0x1000, scoped, tag = 'scoped mem for input reshape']
    %2 = vsyncpa [#allocation1], 0
    %s4 = sshllo.u32 0, 2
    %v5 = vld [vmem:[%s0] sm:%s4]
    %6 = vst [vmem:[#allocation3] sm:%s4] %v5
    %v7 = vld [vmem:[#allocation3] sm:$0x3]
    %vm8 = vcmask 523264
    %9 = vst.msk [vmem:[#allocation2] ss:$2 sm:$0x3] %vm8, %v7
    %v10 = vld [vmem:[#allocation3] sm:$0x3]
    %11 = vrot.lane.b32.xlu0 %v10, 64
    %v12 = vpop.permute.xlu0 %11
    %vm13 = vcmask 523264
    %s14 = scalar_lea.vmem [#allocation2], 1
    %15 = vst.msk [vmem:[%s14] ss:$2 sm:$0x3] %vm13, %v12
    %s17 = sshllo.u32 0, 4
    %v19 = vld [vmem:[#allocation2] sm:%s17]
    %s20 = sshllo.u32 0, 4
    %21 = vst [vmem:[#allocation0] sm:%s20] %v19
    %s23 = ssub.s32 64, 64
    %24 = vsyncadd [#allocation1], %s23
    %s26 = sshll.u32 [#allocation0], 4
    %s27 = int_to_ptr.vmem [resolvable:$true] %s26
    %29 = dma.vmem_to_hbm [thread:$0]  %s27, 64, %s1, [#allocation1]
    %30 = dma.done [#allocation1], 64
    %31 = vsyncpa [#allocation1], 1

// kernel: run_pass.1
$region0: #{run_pass.1}
  #allocation0 [shape = 'u32[]', space=smem, size = 0x4, offset = 0x4, fixed_abs, tag = 'smem constant byte address 0x4 - core index']
  #allocation1 [shape = 'u32[144,128]{1,0:T(1,128)}', space=vmem, size = 0x12000, scoped, tag = 'internal scratch']
  %s0 = inlined_call_operand.vmem [shape: f32[256,32], index: 0, kind: input, shape index: {}]
  %s1 = inlined_call_operand.vmem [shape: bf16[128,32], index: 1, kind: input, shape index: {}]
  %s2 = inlined_call_operand.vmem [shape: f32[128,1], index: 2, kind: input, shape index: {}]
  %s3 = inlined_call_operand.vmem [shape: s32[1,256], index: 3, kind: input, shape index: {}]
  %s4 = inlined_call_operand.vmem [shape: f32[1,256], index: 4, kind: output, shape index: {0}]
  %s5 = inlined_call_operand.vmem [shape: s32[1,256], index: 5, kind: output, shape index: {1}]
  %6 = xla_tuple %s4, %s5
  %s7 = sld [smem:[#allocation0]]
  $region34: #{run_pass.1} parent=0
    _
  %s9 = ssub.s32 1, %s7
  %s10 = scalar_select 0, %s9, %s7
  // Predicated region
  $region2: #{run_pass.1} parent=0 // pred_check
    _
  $region3: #{run_pass.1} parent=0 // pred_check_branch
    %12 = sbr.rel (0) target = $region5
  $region4: #{run_pass.1} parent=0 // pred_region
    _
  $region5: #{run_pass.1} parent=0 // pred_fallthru
    _
  // Predicated region
  $region6: #{run_pass.1} parent=0 // pred_check
    _
  $region7: #{run_pass.1} parent=0 // pred_check_branch
    %14 = sbr.rel (0) target = $region9
  $region8: #{run_pass.1} parent=0 // pred_region
    _
  $region9: #{run_pass.1} parent=0 // pred_fallthru
    _
  // Predicated region
  $region10: #{run_pass.1} parent=0 // pred_check
    _
  $region11: #{run_pass.1} parent=0 // pred_check_branch
    %16 = sbr.rel (0) target = $region13
  $region12: #{run_pass.1} parent=0 // pred_region
    _
  $region13: #{run_pass.1} parent=0 // pred_fallthru
    _
  // Predicated region
  $region14: #{run_pass.1} parent=0 // pred_check
    _
  $region15: #{run_pass.1} parent=0 // pred_check_branch
    %18 = sbr.rel (0) target = $region17
  $region16: #{run_pass.1} parent=0 // pred_region
    _
  $region17: #{run_pass.1} parent=0 // pred_fallthru
    _
  %v20 = vld [vmem:[%s0] sm:$0xff]
  %v21 = vld [vmem:[%s0 + $0x8] sm:$0xff]
  %v22 = vld [vmem:[%s0 + $0x10] sm:$0xff]
  %v23 = vld [vmem:[%s0 + $0x18] sm:$0xff]
  %v24 = vld [vmem:[%s0 + $0x20] sm:$0xff]
  %v25 = vld [vmem:[%s0 + $0x28] sm:$0xff]
  %v26 = vld [vmem:[%s0 + $0x30] sm:$0xff]
  %v27 = vld [vmem:[%s0 + $0x38] sm:$0xff]
  %v28 = vld [vmem:[%s0 + $0x40] sm:$0xff]
  %v29 = vld [vmem:[%s0 + $0x48] sm:$0xff]
  %v30 = vld [vmem:[%s0 + $0x50] sm:$0xff]
  %v31 = vld [vmem:[%s0 + $0x58] sm:$0xff]
  %v32 = vld [vmem:[%s0 + $0x60] sm:$0xff]
  %v33 = vld [vmem:[%s0 + $0x68] sm:$0xff]
  %v34 = vld [vmem:[%s0 + $0x70] sm:$0xff]
  %v35 = vld [vmem:[%s0 + $0x78] sm:$0xff]
  %v36 = vld [vmem:[%s0 + $0x80] sm:$0xff]
  %v37 = vld [vmem:[%s0 + $0x88] sm:$0xff]
  %v38 = vld [vmem:[%s0 + $0x90] sm:$0xff]
  %v39 = vld [vmem:[%s0 + $0x98] sm:$0xff]
  %v40 = vld [vmem:[%s0 + $0xa0] sm:$0xff]
  %v41 = vld [vmem:[%s0 + $0xa8] sm:$0xff]
  %v42 = vld [vmem:[%s0 + $0xb0] sm:$0xff]
  %v43 = vld [vmem:[%s0 + $0xb8] sm:$0xff]
  %v44 = vld [vmem:[%s0 + $0xc0] sm:$0xff]
  %v45 = vld [vmem:[%s0 + $0xc8] sm:$0xff]
  %v46 = vld [vmem:[%s0 + $0xd0] sm:$0xff]
  %v47 = vld [vmem:[%s0 + $0xd8] sm:$0xff]
  %v48 = vld [vmem:[%s0 + $0xe0] sm:$0xff]
  %v49 = vld [vmem:[%s0 + $0xe8] sm:$0xff]
  %v50 = vld [vmem:[%s0 + $0xf0] sm:$0xff]
  %v51 = vld [vmem:[%s0 + $0xf8] sm:$0xff]
  %v52 = vpack.c.bf16 %v21, %v20
  %v53 = vpack.c.bf16 %v23, %v22
  %v54 = vpack.c.bf16 %v25, %v24
  %v55 = vpack.c.bf16 %v27, %v26
  %v56 = vpack.c.bf16 %v29, %v28
  %v57 = vpack.c.bf16 %v31, %v30
  %v58 = vpack.c.bf16 %v33, %v32
  %v59 = vpack.c.bf16 %v35, %v34
  %v60 = vpack.c.bf16 %v37, %v36
  %v61 = vpack.c.bf16 %v39, %v38
  %v62 = vpack.c.bf16 %v41, %v40
  %v63 = vpack.c.bf16 %v43, %v42
  %v64 = vpack.c.bf16 %v45, %v44
  %v65 = vpack.c.bf16 %v47, %v46
  %v66 = vpack.c.bf16 %v49, %v48
  %v67 = vpack.c.bf16 %v51, %v50
  %v68 = vld [vmem:[%s1] sm:$0xf]
  %v69 = vld [vmem:[%s1 + $0x4] sm:$0xf]
  %v70 = vld [vmem:[%s1 + $0x8] sm:$0xf]
  %v71 = vld [vmem:[%s1 + $0xc] sm:$0xf]
  %v72 = vld [vmem:[%s1 + $0x10] sm:$0xf]
  %v73 = vld [vmem:[%s1 + $0x14] sm:$0xf]
  %v74 = vld [vmem:[%s1 + $0x18] sm:$0xf]
  %v75 = vld [vmem:[%s1 + $0x1c] sm:$0xf]
  %v76 = vld [vmem:[%s1 + $0x20] sm:$0xf]
  %v77 = vld [vmem:[%s1 + $0x24] sm:$0xf]
  %v78 = vld [vmem:[%s1 + $0x28] sm:$0xf]
  %v79 = vld [vmem:[%s1 + $0x2c] sm:$0xf]
  %v80 = vld [vmem:[%s1 + $0x30] sm:$0xf]
  %v81 = vld [vmem:[%s1 + $0x34] sm:$0xf]
  %v82 = vld [vmem:[%s1 + $0x38] sm:$0xf]
  %v83 = vld [vmem:[%s1 + $0x3c] sm:$0xf]
  %v84 = vld [vmem:[%s2] sm:$0xff]
  %v85 = vld [vmem:[%s2 + $0x8] sm:$0xff]
  %v86 = vld [vmem:[%s2 + $0x10] sm:$0xff]
  %v87 = vld [vmem:[%s2 + $0x18] sm:$0xff]
  %v88 = vld [vmem:[%s2 + $0x20] sm:$0xff]
  %v89 = vld [vmem:[%s2 + $0x28] sm:$0xff]
  %v90 = vld [vmem:[%s2 + $0x30] sm:$0xff]
  %v91 = vld [vmem:[%s2 + $0x38] sm:$0xff]
  %v92 = vld [vmem:[%s2 + $0x40] sm:$0xff]
  %v93 = vld [vmem:[%s2 + $0x48] sm:$0xff]
  %v94 = vld [vmem:[%s2 + $0x50] sm:$0xff]
  %v95 = vld [vmem:[%s2 + $0x58] sm:$0xff]
  %v96 = vld [vmem:[%s2 + $0x60] sm:$0xff]
  %v97 = vld [vmem:[%s2 + $0x68] sm:$0xff]
  %v98 = vld [vmem:[%s2 + $0x70] sm:$0xff]
  %v99 = vld [vmem:[%s2 + $0x78] sm:$0xff]
  %101 = vset.pattern.permute.xlu0 0
  %102 = vperm.xlu0 %101, %v84
  %v103 = vpop.permute.xlu0 %102
  %106 = vset.pattern.permute.xlu0 0
  %107 = vperm.xlu0 %106, %v85
  %v108 = vpop.permute.xlu0 %107
  %111 = vset.pattern.permute.xlu0 0
  %112 = vperm.xlu0 %111, %v86
  %v113 = vpop.permute.xlu0 %112
  %116 = vset.pattern.permute.xlu0 0
  %117 = vperm.xlu0 %116, %v87
  %v118 = vpop.permute.xlu0 %117
  %121 = vset.pattern.permute.xlu0 0
  %122 = vperm.xlu0 %121, %v88
  %v123 = vpop.permute.xlu0 %122
  %126 = vset.pattern.permute.xlu0 0
  %127 = vperm.xlu0 %126, %v89
  %v128 = vpop.permute.xlu0 %127
  %131 = vset.pattern.permute.xlu0 0
  %132 = vperm.xlu0 %131, %v90
  %v133 = vpop.permute.xlu0 %132
  %136 = vset.pattern.permute.xlu0 0
  %137 = vperm.xlu0 %136, %v91
  %v138 = vpop.permute.xlu0 %137
  %141 = vset.pattern.permute.xlu0 0
  %142 = vperm.xlu0 %141, %v92
  %v143 = vpop.permute.xlu0 %142
  %146 = vset.pattern.permute.xlu0 0
  %147 = vperm.xlu0 %146, %v93
  %v148 = vpop.permute.xlu0 %147
  %151 = vset.pattern.permute.xlu0 0
  %152 = vperm.xlu0 %151, %v94
  %v153 = vpop.permute.xlu0 %152
  %156 = vset.pattern.permute.xlu0 0
  %157 = vperm.xlu0 %156, %v95
  %v158 = vpop.permute.xlu0 %157
  %161 = vset.pattern.permute.xlu0 0
  %162 = vperm.xlu0 %161, %v96
  %v163 = vpop.permute.xlu0 %162
  %166 = vset.pattern.permute.xlu0 0
  %167 = vperm.xlu0 %166, %v97
  %v168 = vpop.permute.xlu0 %167
  %171 = vset.pattern.permute.xlu0 0
  %172 = vperm.xlu0 %171, %v98
  %v173 = vpop.permute.xlu0 %172
  %176 = vset.pattern.permute.xlu0 0
  %177 = vperm.xlu0 %176, %v99
  %v178 = vpop.permute.xlu0 %177
  %v196 = vunpack.c.l.b16 %v68
  %v197 = vunpack.c.l.b16 %v69
  %v198 = vunpack.c.l.b16 %v70
  %v199 = vunpack.c.l.b16 %v71
  %v200 = vunpack.c.l.b16 %v72
  %v201 = vunpack.c.l.b16 %v73
  %v202 = vunpack.c.l.b16 %v74
  %v203 = vunpack.c.l.b16 %v75
  %v204 = vunpack.c.l.b16 %v76
  %v205 = vunpack.c.l.b16 %v77
  %v206 = vunpack.c.l.b16 %v78
  %v207 = vunpack.c.l.b16 %v79
  %v208 = vunpack.c.l.b16 %v80
  %v209 = vunpack.c.l.b16 %v81
  %v210 = vunpack.c.l.b16 %v82
  %v211 = vunpack.c.l.b16 %v83
  %v212 = vpack.c.b16 %v197, %v196
  %v213 = vpack.c.b16 %v199, %v198
  %v214 = vpack.c.b16 %v201, %v200
  %v215 = vpack.c.b16 %v203, %v202
  %v216 = vpack.c.b16 %v205, %v204
  %v217 = vpack.c.b16 %v207, %v206
  %v218 = vpack.c.b16 %v209, %v208
  %v219 = vpack.c.b16 %v211, %v210
  %vm220 = vcmask 261120
  %v222 = vsel %vm220, %v212, 0
  %v225 = vsel %vm220, %v213, 0
  %v228 = vsel %vm220, %v214, 0
  %v231 = vsel %vm220, %v215, 0
  %v234 = vsel %vm220, %v216, 0
  %v237 = vsel %vm220, %v217, 0
  %v240 = vsel %vm220, %v218, 0
  %v243 = vsel %vm220, %v219, 0
  %v246 = vsel %vm220, %v52, 0
  %v249 = vsel %vm220, %v53, 0
  %v252 = vsel %vm220, %v54, 0
  %v255 = vsel %vm220, %v55, 0
  %v258 = vsel %vm220, %v56, 0
  %v261 = vsel %vm220, %v57, 0
  %v264 = vsel %vm220, %v58, 0
  %v267 = vsel %vm220, %v59, 0
  %v270 = vsel %vm220, %v60, 0
  %v273 = vsel %vm220, %v61, 0
  %v276 = vsel %vm220, %v62, 0
  %v279 = vsel %vm220, %v63, 0
  %v282 = vsel %vm220, %v64, 0
  %v285 = vsel %vm220, %v65, 0
  %v288 = vsel %vm220, %v66, 0
  %v291 = vsel %vm220, %v67, 0
  %293 = vmatprep.subr.bf16.mxu0 0
  %294 = vmatpush1.bf16.xpose.msra.mxu0 %v246
  %295 = vmatprep.subr.bf16.mxu0 0
  %296 = vmatpush1.bf16.xpose.msra.mxu0 %v249
  %297 = vmatprep.subr.bf16.mxu0 0
  %298 = vmatpush1.bf16.xpose.msra.mxu0 %v252
  %299 = vmatprep.subr.bf16.mxu0 0
  %300 = vmatpush1.bf16.xpose.msra.mxu0 %v255
  %301 = vmatprep.subr.bf16.mxu0 0
  %302 = vmatpush1.bf16.xpose.msra.mxu0 %v258
  %303 = vmatprep.subr.bf16.mxu0 0
  %304 = vmatpush1.bf16.xpose.msra.mxu0 %v261
  %305 = vmatprep.subr.bf16.mxu0 0
  %306 = vmatpush1.bf16.xpose.msra.mxu0 %v264
  %307 = vmatprep.subr.bf16.mxu0 0
  %308 = vmatpush1.bf16.xpose.msra.mxu0 %v267
  %309 = vmatprep.subr.bf16.mxu0 0
  %310 = vmatpush1.bf16.xpose.msra.mxu0 %v270
  %311 = vmatprep.subr.bf16.mxu0 0
  %312 = vmatpush1.bf16.xpose.msra.mxu0 %v273
  %313 = vmatprep.subr.bf16.mxu0 0
  %314 = vmatpush1.bf16.xpose.msra.mxu0 %v276
  %315 = vmatprep.subr.bf16.mxu0 0
  %316 = vmatpush1.bf16.xpose.msra.mxu0 %v279
  %317 = vmatprep.subr.bf16.mxu0 0
  %318 = vmatpush1.bf16.xpose.msra.mxu0 %v282
  %319 = vmatprep.subr.bf16.mxu0 0
  %320 = vmatpush1.bf16.xpose.msra.mxu0 %v285
  %321 = vmatprep.subr.bf16.mxu0 0
  %322 = vmatpush1.bf16.xpose.msra.mxu0 %v288
  %323 = vmatprep.subr.bf16.mxu0 0
  %324 = vmatpush1.bf16.xpose.msra.mxu0 %v291
  %325 = vmatprep.mubr.bf16.mxu0 0
  %326 = vmatmul.mubr.bf16.gmra.mrb[0].mxu0 %v222
  %v327 = vpop.f32.mrb[0].mxu0
  %v328 = vadd.f32 %v103, %v327
  %v329 = vpop.f32.mrb[0].mxu0
  %v330 = vadd.f32 %v103, %v329
  %v331 = vpop.f32.mrb[0].mxu0
  %v332 = vadd.f32 %v108, %v331
  %v333 = vpop.f32.mrb[0].mxu0
  %v334 = vadd.f32 %v108, %v333
  %335 = vmatprep.mubr.bf16.mxu0 0
  %336 = vmatmul.mubr.bf16.gmra.mrb[0].mxu0 %v225
  %v337 = vpop.f32.mrb[0].mxu0
  %v338 = vadd.f32 %v113, %v337
  %v339 = vpop.f32.mrb[0].mxu0
  %v340 = vadd.f32 %v113, %v339
  %v341 = vpop.f32.mrb[0].mxu0
  %v342 = vadd.f32 %v118, %v341
  %v343 = vpop.f32.mrb[0].mxu0
  %v344 = vadd.f32 %v118, %v343
  %345 = vmatprep.mubr.bf16.mxu0 0
  %346 = vmatmul.mubr.bf16.gmra.mrb[0].mxu0 %v228
  %v347 = vpop.f32.mrb[0].mxu0
  %v348 = vadd.f32 %v123, %v347
  %v349 = vpop.f32.mrb[0].mxu0
  %v350 = vadd.f32 %v123, %v349
  %v351 = vpop.f32.mrb[0].mxu0
  %v352 = vadd.f32 %v128, %v351
  %v353 = vpop.f32.mrb[0].mxu0
  %v354 = vadd.f32 %v128, %v353
  %355 = vmatprep.mubr.bf16.mxu0 0
  %356 = vmatmul.mubr.bf16.gmra.mrb[0].mxu0 %v231
  %v357 = vpop.f32.mrb[0].mxu0
  %v358 = vadd.f32 %v133, %v357
  %v359 = vpop.f32.mrb[0].mxu0
  %v360 = vadd.f32 %v133, %v359
  %v361 = vpop.f32.mrb[0].mxu0
  %v362 = vadd.f32 %v138, %v361
  %v363 = vpop.f32.mrb[0].mxu0
  %v364 = vadd.f32 %v138, %v363
  %365 = vmatprep.mubr.bf16.mxu0 0
  %366 = vmatmul.mubr.bf16.gmra.mrb[0].mxu0 %v234
  %v367 = vpop.f32.mrb[0].mxu0
  %v368 = vadd.f32 %v143, %v367
  %v369 = vpop.f32.mrb[0].mxu0
  %v370 = vadd.f32 %v143, %v369
  %v371 = vpop.f32.mrb[0].mxu0
  %v372 = vadd.f32 %v148, %v371
  %v373 = vpop.f32.mrb[0].mxu0
  %v374 = vadd.f32 %v148, %v373
  %375 = vmatprep.mubr.bf16.mxu0 0
  %376 = vmatmul.mubr.bf16.gmra.mrb[0].mxu0 %v237
  %v377 = vpop.f32.mrb[0].mxu0
  %v378 = vadd.f32 %v153, %v377
  %v379 = vpop.f32.mrb[0].mxu0
  %v380 = vadd.f32 %v153, %v379
  %v381 = vpop.f32.mrb[0].mxu0
  %v382 = vadd.f32 %v158, %v381
  %v383 = vpop.f32.mrb[0].mxu0
  %v384 = vadd.f32 %v158, %v383
  %385 = vmatprep.mubr.bf16.mxu0 0
  %386 = vmatmul.mubr.bf16.gmra.mrb[0].mxu0 %v240
  %v387 = vpop.f32.mrb[0].mxu0
  %v388 = vadd.f32 %v163, %v387
  %v389 = vpop.f32.mrb[0].mxu0
  %v390 = vadd.f32 %v163, %v389
  %v391 = vpop.f32.mrb[0].mxu0
  %v392 = vadd.f32 %v168, %v391
  %v393 = vpop.f32.mrb[0].mxu0
  %v394 = vadd.f32 %v168, %v393
  %395 = vmatprep.mubr.bf16.mxu0 0
  %396 = vmatmul.mubr.bf16.gmra.mrb[0].mxu0 %v243
  %v397 = vpop.f32.mrb[0].mxu0
  %v398 = vadd.f32 %v173, %v397
  %v399 = vpop.f32.mrb[0].mxu0
  %v400 = vadd.f32 %v173, %v399
  %v401 = vpop.f32.mrb[0].mxu0
  %v402 = vadd.f32 %v178, %v401
  %v403 = vpop.f32.mrb[0].mxu0
  %v404 = vadd.f32 %v178, %v403
  %405 = vdwg.mxu0
  %v406 = vld [vmem:[%s3] sm:$0x3]
  %v407 = vlaneseq
  %v408 = vshrl.u32 %v407, 7
  %v409 = vadd.s32 %v408, 8
  %v410 = vadd.s32 %v408, 16
  %v411 = vadd.s32 %v408, 24
  %v412 = vadd.s32 %v408, 32
  %v413 = vadd.s32 %v408, 40
  %v414 = vadd.s32 %v408, 48
  %v415 = vadd.s32 %v408, 56
  %v416 = vadd.s32 %v408, 64
  %v417 = vadd.s32 %v408, 72
  %v418 = vadd.s32 %v408, 80
  %v419 = vadd.s32 %v408, 88
  %v420 = vadd.s32 %v408, 96
  %v421 = vadd.s32 %v408, 104
  %v422 = vadd.s32 %v408, 112
  %v423 = vadd.s32 %v408, 120
  %v424 = vmax.f32 %v328, %v338
  %v425 = vmax.f32 %v332, %v342
  %v426 = vmax.f32 %v424, %v348
  %v427 = vmax.f32 %v425, %v352
  %v428 = vmax.f32 %v426, %v358
  %v429 = vmax.f32 %v427, %v362
  %v430 = vmax.f32 %v428, %v368
  %v431 = vmax.f32 %v429, %v372
  %v432 = vmax.f32 %v430, %v378
  %v433 = vmax.f32 %v431, %v382
  %v434 = vmax.f32 %v432, %v388
  %v435 = vmax.f32 %v433, %v392
  %v436 = vmax.f32 %v434, %v398
  %v437 = vmax.f32 %v435, %v402
  %v438 = vmax.f32 %v436, %v437
  %v439 = vrot.slane %v438, 4
  %v440 = vmax.f32 %v438, %v439
  %v441 = vrot.slane %v440, 2
  %v442 = vmax.f32 %v440, %v441
  %v443 = vrot.slane %v442, 1
  %v444 = vmax.f32 %v442, %v443
  %v445 = vmax.f32 %v330, %v340
  %v446 = vmax.f32 %v334, %v344
  %v447 = vmax.f32 %v445, %v350
  %v448 = vmax.f32 %v446, %v354
  %v449 = vmax.f32 %v447, %v360
  %v450 = vmax.f32 %v448, %v364
  %v451 = vmax.f32 %v449, %v370
  %v452 = vmax.f32 %v450, %v374
  %v453 = vmax.f32 %v451, %v380
  %v454 = vmax.f32 %v452, %v384
  %v455 = vmax.f32 %v453, %v390
  %v456 = vmax.f32 %v454, %v394
  %v457 = vmax.f32 %v455, %v400
  %v458 = vmax.f32 %v456, %v404
  %v459 = vmax.f32 %v457, %v458
  %v460 = vrot.slane %v459, 4
  %v461 = vmax.f32 %v459, %v460
  %v462 = vrot.slane %v461, 2
  %v463 = vmax.f32 %v461, %v462
  %v464 = vrot.slane %v463, 1
  %v465 = vmax.f32 %v463, %v464
  %v466 = vsub.f32 %v328, %v444
  %v467 = vsub.f32 %v330, %v465
  %v468 = vsub.f32 %v332, %v444
  %v469 = vsub.f32 %v334, %v465
  %v470 = vsub.f32 %v338, %v444
  %v471 = vsub.f32 %v340, %v465
  %v472 = vsub.f32 %v342, %v444
  %v473 = vsub.f32 %v344, %v465
  %v474 = vsub.f32 %v348, %v444
  %v475 = vsub.f32 %v350, %v465
  %v476 = vsub.f32 %v352, %v444
  %v477 = vsub.f32 %v354, %v465
  %v478 = vsub.f32 %v358, %v444
  %v479 = vsub.f32 %v360, %v465
  %v480 = vsub.f32 %v362, %v444
  %v481 = vsub.f32 %v364, %v465
  %v482 = vsub.f32 %v368, %v444
  %v483 = vsub.f32 %v370, %v465
  %v484 = vsub.f32 %v372, %v444
  %v485 = vsub.f32 %v374, %v465
  %v486 = vsub.f32 %v378, %v444
  %v487 = vsub.f32 %v380, %v465
  %v488 = vsub.f32 %v382, %v444
  %v489 = vsub.f32 %v384, %v465
  %v490 = vsub.f32 %v388, %v444
  %v491 = vsub.f32 %v390, %v465
  %v492 = vsub.f32 %v392, %v444
  %v493 = vsub.f32 %v394, %v465
  %v494 = vsub.f32 %v398, %v444
  %v495 = vsub.f32 %v400, %v465
  %v496 = vsub.f32 %v402, %v444
  %v497 = vsub.f32 %v404, %v465
  %v498 = vmul.f32 %v466, 1.442695
  %v499 = vpow.pop %v498
  %v500 = vmul.f32 %v467, 1.442695
  %v501 = vpow.pop %v500
  %v502 = vmul.f32 %v468, 1.442695
  %v503 = vpow.pop %v502
  %v504 = vmul.f32 %v469, 1.442695
  %v505 = vpow.pop %v504
  %v506 = vmul.f32 %v470, 1.442695
  %v507 = vpow.pop %v506
  %v508 = vmul.f32 %v471, 1.442695
  %v509 = vpow.pop %v508
  %v510 = vmul.f32 %v472, 1.442695
  %v511 = vpow.pop %v510
  %v512 = vmul.f32 %v473, 1.442695
  %v513 = vpow.pop %v512
  %v514 = vmul.f32 %v474, 1.442695
  %v515 = vpow.pop %v514
  %v516 = vmul.f32 %v475, 1.442695
  %v517 = vpow.pop %v516
  %v518 = vmul.f32 %v476, 1.442695
  %v519 = vpow.pop %v518
  %v520 = vmul.f32 %v477, 1.442695
  %v521 = vpow.pop %v520
  %v522 = vmul.f32 %v478, 1.442695
  %v523 = vpow.pop %v522
  %v524 = vmul.f32 %v479, 1.442695
  %v525 = vpow.pop %v524
  %v526 = vmul.f32 %v480, 1.442695
  %v527 = vpow.pop %v526
  %v528 = vmul.f32 %v481, 1.442695
  %v529 = vpow.pop %v528
  %v530 = vmul.f32 %v482, 1.442695
  %v531 = vpow.pop %v530
  %v532 = vmul.f32 %v483, 1.442695
  %v533 = vpow.pop %v532
  %v534 = vmul.f32 %v484, 1.442695
  %v535 = vpow.pop %v534
  %v536 = vmul.f32 %v485, 1.442695
  %v537 = vpow.pop %v536
  %v538 = vmul.f32 %v486, 1.442695
  %v539 = vpow.pop %v538
  %v540 = vmul.f32 %v487, 1.442695
  %v541 = vpow.pop %v540
  %v542 = vmul.f32 %v488, 1.442695
  %v543 = vpow.pop %v542
  %v544 = vmul.f32 %v489, 1.442695
  %v545 = vpow.pop %v544
  %v546 = vmul.f32 %v490, 1.442695
  %v547 = vpow.pop %v546
  %v548 = vmul.f32 %v491, 1.442695
  %v549 = vpow.pop %v548
  %v550 = vmul.f32 %v492, 1.442695
  %v551 = vpow.pop %v550
  %v552 = vmul.f32 %v493, 1.442695
  %v553 = vpow.pop %v552
  %v554 = vmul.f32 %v494, 1.442695
  %v555 = vpow.pop %v554
  %v556 = vmul.f32 %v495, 1.442695
  %v557 = vpow.pop %v556
  %v558 = vmul.f32 %v496, 1.442695
  %v559 = vpow.pop %v558
  %v560 = vmul.f32 %v497, 1.442695
  %v561 = vpow.pop %v560
  %v562 = vadd.f32 %v499, %v503
  %v563 = vadd.f32 %v562, %v507
  %v564 = vadd.f32 %v563, %v511
  %v565 = vadd.f32 %v564, %v515
  %v566 = vadd.f32 %v565, %v519
  %v567 = vadd.f32 %v566, %v523
  %v568 = vadd.f32 %v567, %v527
  %v569 = vadd.f32 %v568, %v531
  %v570 = vadd.f32 %v569, %v535
  %v571 = vadd.f32 %v570, %v539
  %v572 = vadd.f32 %v571, %v543
  %v573 = vadd.f32 %v572, %v547
  %v574 = vadd.f32 %v573, %v551
  %v575 = vadd.f32 %v574, %v555
  %v576 = vadd.f32 %v575, %v559
  %v577 = vrot.slane %v576, 4
  %v578 = vadd.f32 %v576, %v577
  %v579 = vrot.slane %v578, 2
  %v580 = vadd.f32 %v578, %v579
  %v581 = vrot.slane %v580, 1
  %v582 = vadd.f32 %v580, %v581
  %v583 = vadd.f32 %v501, %v505
  %v584 = vadd.f32 %v583, %v509
  %v585 = vadd.f32 %v584, %v513
  %v586 = vadd.f32 %v585, %v517
  %v587 = vadd.f32 %v586, %v521
  %v588 = vadd.f32 %v587, %v525
  %v589 = vadd.f32 %v588, %v529
  %v590 = vadd.f32 %v589, %v533
  %v591 = vadd.f32 %v590, %v537
  %v592 = vadd.f32 %v591, %v541
  %v593 = vadd.f32 %v592, %v545
  %v594 = vadd.f32 %v593, %v549
  %v595 = vadd.f32 %v594, %v553
  %v596 = vadd.f32 %v595, %v557
  %v597 = vadd.f32 %v596, %v561
  %v598 = vrot.slane %v597, 4
  %v599 = vadd.f32 %v597, %v598
  %v600 = vrot.slane %v599, 2
  %v601 = vadd.f32 %v599, %v600
  %v602 = vrot.slane %v601, 1
  %v603 = vadd.f32 %v601, %v602
  %v604 = vlog2.pop %v582
  %v605 = vmul.f32 %v604, 0.6931472
  %v606 = vlog2.pop %v603
  %v607 = vmul.f32 %v606, 0.6931472
  %v608 = vadd.f32 %v444, %v605
  %v609 = vadd.f32 %v465, %v607
  %v610 = vlaneseq
  %v611 = vshrl.u32 %v610, 7
  %v612 = vsub.s32 0, %v611
  %v613 = vrot.slane %v406, %v612
  %v614 = vlaneseq
  %v615 = vshrl.u32 %v614, 7
  %v616 = vsub.s32 1, %v615
  %v617 = vrot.slane %v406, %v616
  %vm618 = vcmp.eq.s32.totalorder %v408, %v613
  %vm619 = vcmp.eq.s32.totalorder %v408, %v617
  %vm620 = vcmp.eq.s32.totalorder %v409, %v613
  %vm621 = vcmp.eq.s32.totalorder %v409, %v617
  %vm622 = vcmp.eq.s32.totalorder %v410, %v613
  %vm623 = vcmp.eq.s32.totalorder %v410, %v617
  %vm624 = vcmp.eq.s32.totalorder %v411, %v613
  %vm625 = vcmp.eq.s32.totalorder %v411, %v617
  %vm626 = vcmp.eq.s32.totalorder %v412, %v613
  %vm627 = vcmp.eq.s32.totalorder %v412, %v617
  %vm628 = vcmp.eq.s32.totalorder %v413, %v613
  %vm629 = vcmp.eq.s32.totalorder %v413, %v617
  %vm630 = vcmp.eq.s32.totalorder %v414, %v613
  %vm631 = vcmp.eq.s32.totalorder %v414, %v617
  %vm632 = vcmp.eq.s32.totalorder %v415, %v613
  %vm633 = vcmp.eq.s32.totalorder %v415, %v617
  %vm634 = vcmp.eq.s32.totalorder %v416, %v613
  %vm635 = vcmp.eq.s32.totalorder %v416, %v617
  %vm636 = vcmp.eq.s32.totalorder %v417, %v613
  %vm637 = vcmp.eq.s32.totalorder %v417, %v617
  %vm638 = vcmp.eq.s32.totalorder %v418, %v613
  %vm639 = vcmp.eq.s32.totalorder %v418, %v617
  %vm640 = vcmp.eq.s32.totalorder %v419, %v613
  %vm641 = vcmp.eq.s32.totalorder %v419, %v617
  %vm642 = vcmp.eq.s32.totalorder %v420, %v613
  %vm643 = vcmp.eq.s32.totalorder %v420, %v617
  %vm644 = vcmp.eq.s32.totalorder %v421, %v613
  %vm645 = vcmp.eq.s32.totalorder %v421, %v617
  %vm646 = vcmp.eq.s32.totalorder %v422, %v613
  %vm647 = vcmp.eq.s32.totalorder %v422, %v617
  %vm648 = vcmp.eq.s32.totalorder %v423, %v613
  %vm649 = vcmp.eq.s32.totalorder %v423, %v617
  %v650 = vsel %vm618, %v328, 0.0
  %v651 = vsel %vm619, %v330, 0.0
  %v652 = vsel %vm620, %v332, 0.0
  %v653 = vsel %vm621, %v334, 0.0
  %v654 = vsel %vm622, %v338, 0.0
  %v655 = vsel %vm623, %v340, 0.0
  %v656 = vsel %vm624, %v342, 0.0
  %v657 = vsel %vm625, %v344, 0.0
  %v658 = vsel %vm626, %v348, 0.0
  %v659 = vsel %vm627, %v350, 0.0
  %v660 = vsel %vm628, %v352, 0.0
  %v661 = vsel %vm629, %v354, 0.0
  %v662 = vsel %vm630, %v358, 0.0
  %v663 = vsel %vm631, %v360, 0.0
  %v664 = vsel %vm632, %v362, 0.0
  %v665 = vsel %vm633, %v364, 0.0
  %v666 = vsel %vm634, %v368, 0.0
  %v667 = vsel %vm635, %v370, 0.0
  %v668 = vsel %vm636, %v372, 0.0
  %v669 = vsel %vm637, %v374, 0.0
  %v670 = vsel %vm638, %v378, 0.0
  %v671 = vsel %vm639, %v380, 0.0
  %v672 = vsel %vm640, %v382, 0.0
  %v673 = vsel %vm641, %v384, 0.0
  %v674 = vsel %vm642, %v388, 0.0
  %v675 = vsel %vm643, %v390, 0.0
  %v676 = vsel %vm644, %v392, 0.0
  %v677 = vsel %vm645, %v394, 0.0
  %v678 = vsel %vm646, %v398, 0.0
  %v679 = vsel %vm647, %v400, 0.0
  %v680 = vsel %vm648, %v402, 0.0
  %v681 = vsel %vm649, %v404, 0.0
  %v682 = vadd.f32 %v650, %v652
  %v683 = vadd.f32 %v682, %v654
  %v684 = vadd.f32 %v683, %v656
  %v685 = vadd.f32 %v684, %v658
  %v686 = vadd.f32 %v685, %v660
  %v687 = vadd.f32 %v686, %v662
  %v688 = vadd.f32 %v687, %v664
  %v689 = vadd.f32 %v688, %v666
  %v690 = vadd.f32 %v689, %v668
  %v691 = vadd.f32 %v690, %v670
  %v692 = vadd.f32 %v691, %v672
  %v693 = vadd.f32 %v692, %v674
  %v694 = vadd.f32 %v693, %v676
  %v695 = vadd.f32 %v694, %v678
  %v696 = vadd.f32 %v695, %v680
  %v697 = vrot.slane %v696, 4
  %v698 = vadd.f32 %v696, %v697
  %v699 = vrot.slane %v698, 2
  %v700 = vadd.f32 %v698, %v699
  %v701 = vrot.slane %v700, 1
  %v702 = vadd.f32 %v700, %v701
  %v703 = vadd.f32 %v651, %v653
  %v704 = vadd.f32 %v703, %v655
  %v705 = vadd.f32 %v704, %v657
  %v706 = vadd.f32 %v705, %v659
  %v707 = vadd.f32 %v706, %v661
  %v708 = vadd.f32 %v707, %v663
  %v709 = vadd.f32 %v708, %v665
  %v710 = vadd.f32 %v709, %v667
  %v711 = vadd.f32 %v710, %v669
  %v712 = vadd.f32 %v711, %v671
  %v713 = vadd.f32 %v712, %v673
  %v714 = vadd.f32 %v713, %v675
  %v715 = vadd.f32 %v714, %v677
  %v716 = vadd.f32 %v715, %v679
  %v717 = vadd.f32 %v716, %v681
  %v718 = vrot.slane %v717, 4
  %v719 = vadd.f32 %v717, %v718
  %v720 = vrot.slane %v719, 2
  %v721 = vadd.f32 %v719, %v720
  %v722 = vrot.slane %v721, 1
  %v723 = vadd.f32 %v721, %v722
  %v724 = vsub.f32 %v608, %v702
  %v725 = vsub.f32 %v609, %v723
  %v728 = vcombine.low %v724, %v725
  %v730 = vunpack.c.l.s4 1966171168
  %v731 = vunpack.c.0.s8 %v730
  %v732 = vlaneseq
  %v733 = vshrl.u32 %v732, 7
  %v734 = vsub.s32 %v731, %v733
  %v735 = vrot.slane %v728, %v734
  %v737 = vunpack.c.l.s4 1966171168
  %v738 = vunpack.c.0.s8 %v737
  %v739 = vlaneseq
  %v740 = vshrl.u32 %v739, 7
  %v741 = vsub.s32 %v738, %v740
  %v742 = vrot.slane %v735, %v741
  %v744 = vlaneseq
  %vm745 = vcmp.ge.s32.totalorder %v744, 0
  %vm746 = vcmp.lt.s32.totalorder %v744, 256
  %vm747 = vmand %vm745, %vm746
  %748 = vst.msk [vmem:[%s4] sm:$0x3] %vm747, %v742
  %vm749 = vcmp.eq.f32.partialorder %v328, %v444
  %vm750 = vcmp.eq.f32.partialorder %v330, %v465
  %vm751 = vcmp.eq.f32.partialorder %v332, %v444
  %vm752 = vcmp.eq.f32.partialorder %v334, %v465
  %vm753 = vcmp.eq.f32.partialorder %v338, %v444
  %vm754 = vcmp.eq.f32.partialorder %v340, %v465
  %vm755 = vcmp.eq.f32.partialorder %v342, %v444
  %vm756 = vcmp.eq.f32.partialorder %v344, %v465
  %vm757 = vcmp.eq.f32.partialorder %v348, %v444
  %vm758 = vcmp.eq.f32.partialorder %v350, %v465
  %vm759 = vcmp.eq.f32.partialorder %v352, %v444
  %vm760 = vcmp.eq.f32.partialorder %v354, %v465
  %vm761 = vcmp.eq.f32.partialorder %v358, %v444
  %vm762 = vcmp.eq.f32.partialorder %v360, %v465
  %vm763 = vcmp.eq.f32.partialorder %v362, %v444
  %vm764 = vcmp.eq.f32.partialorder %v364, %v465
  %vm765 = vcmp.eq.f32.partialorder %v368, %v444
  %vm766 = vcmp.eq.f32.partialorder %v370, %v465
  %vm767 = vcmp.eq.f32.partialorder %v372, %v444
  %vm768 = vcmp.eq.f32.partialorder %v374, %v465
  %vm769 = vcmp.eq.f32.partialorder %v378, %v444
  %vm770 = vcmp.eq.f32.partialorder %v380, %v465
  %vm771 = vcmp.eq.f32.partialorder %v382, %v444
  %vm772 = vcmp.eq.f32.partialorder %v384, %v465
  %vm773 = vcmp.eq.f32.partialorder %v388, %v444
  %vm774 = vcmp.eq.f32.partialorder %v390, %v465
  %vm775 = vcmp.eq.f32.partialorder %v392, %v444
  %vm776 = vcmp.eq.f32.partialorder %v394, %v465
  %vm777 = vcmp.eq.f32.partialorder %v398, %v444
  %vm778 = vcmp.eq.f32.partialorder %v400, %v465
  %vm779 = vcmp.eq.f32.partialorder %v402, %v444
  %vm780 = vcmp.eq.f32.partialorder %v404, %v465
  %v781 = vsel %vm749, %v408, 128
  %v782 = vsel %vm750, %v408, 128
  %v783 = vsel %vm751, %v409, 128
  %v784 = vsel %vm752, %v409, 128
  %v785 = vsel %vm753, %v410, 128
  %v786 = vsel %vm754, %v410, 128
  %v787 = vsel %vm755, %v411, 128
  %v788 = vsel %vm756, %v411, 128
  %v789 = vsel %vm757, %v412, 128
  %v790 = vsel %vm758, %v412, 128
  %v791 = vsel %vm759, %v413, 128
  %v792 = vsel %vm760, %v413, 128
  %v793 = vsel %vm761, %v414, 128
  %v794 = vsel %vm762, %v414, 128
  %v795 = vsel %vm763, %v415, 128
  %v796 = vsel %vm764, %v415, 128
  %v797 = vsel %vm765, %v416, 128
  %v798 = vsel %vm766, %v416, 128
  %v799 = vsel %vm767, %v417, 128
  %v800 = vsel %vm768, %v417, 128
  %v801 = vsel %vm769, %v418, 128
  %v802 = vsel %vm770, %v418, 128
  %v803 = vsel %vm771, %v419, 128
  %v804 = vsel %vm772, %v419, 128
  %v805 = vsel %vm773, %v420, 128
  %v806 = vsel %vm774, %v420, 128
  %v807 = vsel %vm775, %v421, 128
  %v808 = vsel %vm776, %v421, 128
  %v809 = vsel %vm777, %v422, 128
  %v810 = vsel %vm778, %v422, 128
  %v811 = vsel %vm779, %v423, 128
  %v812 = vsel %vm780, %v423, 128
  %vm813 = vcmp.lt.s32.totalorder %v781, %v785
  %v814 = vsel %vm813, %v781, %v785
  %vm815 = vcmp.lt.s32.totalorder %v783, %v787
  %v816 = vsel %vm815, %v783, %v787
  %vm817 = vcmp.lt.s32.totalorder %v814, %v789
  %v818 = vsel %vm817, %v814, %v789
  %vm819 = vcmp.lt.s32.totalorder %v816, %v791
  %v820 = vsel %vm819, %v816, %v791
  %vm821 = vcmp.lt.s32.totalorder %v818, %v793
  %v822 = vsel %vm821, %v818, %v793
  %vm823 = vcmp.lt.s32.totalorder %v820, %v795
  %v824 = vsel %vm823, %v820, %v795
  %vm825 = vcmp.lt.s32.totalorder %v822, %v797
  %v826 = vsel %vm825, %v822, %v797
  %vm827 = vcmp.lt.s32.totalorder %v824, %v799
  %v828 = vsel %vm827, %v824, %v799
  %vm829 = vcmp.lt.s32.totalorder %v826, %v801
  %v830 = vsel %vm829, %v826, %v801
  %vm831 = vcmp.lt.s32.totalorder %v828, %v803
  %v832 = vsel %vm831, %v828, %v803
  %vm833 = vcmp.lt.s32.totalorder %v830, %v805
  %v834 = vsel %vm833, %v830, %v805
  %vm835 = vcmp.lt.s32.totalorder %v832, %v807
  %v836 = vsel %vm835, %v832, %v807
  %vm837 = vcmp.lt.s32.totalorder %v834, %v809
  %v838 = vsel %vm837, %v834, %v809
  %vm839 = vcmp.lt.s32.totalorder %v836, %v811
  %v840 = vsel %vm839, %v836, %v811
  %vm841 = vcmp.lt.s32.totalorder %v838, %v840
  %v842 = vsel %vm841, %v838, %v840
  %v843 = vrot.slane %v842, 4
  %vm844 = vcmp.lt.s32.totalorder %v842, %v843
  %v845 = vsel %vm844, %v842, %v843
  %v846 = vrot.slane %v845, 2
  %vm847 = vcmp.lt.s32.totalorder %v845, %v846
  %v848 = vsel %vm847, %v845, %v846
  %v849 = vrot.slane %v848, 1
  %vm850 = vcmp.lt.s32.totalorder %v848, %v849
  %v851 = vsel %vm850, %v848, %v849
  %vm852 = vcmp.lt.s32.totalorder %v782, %v786
  %v853 = vsel %vm852, %v782, %v786
  %vm854 = vcmp.lt.s32.totalorder %v784, %v788
  %v855 = vsel %vm854, %v784, %v788
  %vm856 = vcmp.lt.s32.totalorder %v853, %v790
  %v857 = vsel %vm856, %v853, %v790
  %vm858 = vcmp.lt.s32.totalorder %v855, %v792
  %v859 = vsel %vm858, %v855, %v792
  %vm860 = vcmp.lt.s32.totalorder %v857, %v794
  %v861 = vsel %vm860, %v857, %v794
  %vm862 = vcmp.lt.s32.totalorder %v859, %v796
  %v863 = vsel %vm862, %v859, %v796
  %vm864 = vcmp.lt.s32.totalorder %v861, %v798
  %v865 = vsel %vm864, %v861, %v798
  %vm866 = vcmp.lt.s32.totalorder %v863, %v800
  %v867 = vsel %vm866, %v863, %v800
  %vm868 = vcmp.lt.s32.totalorder %v865, %v802
  %v869 = vsel %vm868, %v865, %v802
  %vm870 = vcmp.lt.s32.totalorder %v867, %v804
  %v871 = vsel %vm870, %v867, %v804
  %vm872 = vcmp.lt.s32.totalorder %v869, %v806
  %v873 = vsel %vm872, %v869, %v806
  %vm874 = vcmp.lt.s32.totalorder %v871, %v808
  %v875 = vsel %vm874, %v871, %v808
  %vm876 = vcmp.lt.s32.totalorder %v873, %v810
  %v877 = vsel %vm876, %v873, %v810
  %vm878 = vcmp.lt.s32.totalorder %v875, %v812
  %v879 = vsel %vm878, %v875, %v812
  %vm880 = vcmp.lt.s32.totalorder %v877, %v879
  %v881 = vsel %vm880, %v877, %v879
  %v882 = vrot.slane %v881, 4
  %vm883 = vcmp.lt.s32.totalorder %v881, %v882
  %v884 = vsel %vm883, %v881, %v882
  %v885 = vrot.slane %v884, 2
  %vm886 = vcmp.lt.s32.totalorder %v884, %v885
  %v887 = vsel %vm886, %v884, %v885
  %v888 = vrot.slane %v887, 1
  %vm889 = vcmp.lt.s32.totalorder %v887, %v888
  %v890 = vsel %vm889, %v887, %v888
  %v891 = vcombine.low %v851, %v890
  %v893 = vunpack.c.l.s4 1966171168
  %v894 = vunpack.c.0.s8 %v893
  %v895 = vlaneseq
  %v896 = vshrl.u32 %v895, 7
  %v897 = vsub.s32 %v894, %v896
  %v898 = vrot.slane %v891, %v897
  %v900 = vunpack.c.l.s4 1966171168
  %v901 = vunpack.c.0.s8 %v900
  %v902 = vlaneseq
  %v903 = vshrl.u32 %v902, 7
  %v904 = vsub.s32 %v901, %v903
  %v905 = vrot.slane %v898, %v904
  %906 = vst.msk [vmem:[%s5] sm:$0x3] %vm747, %v905
  // Predicated region
  $region18: #{run_pass.1} parent=0 // pred_check
    _
  $region19: #{run_pass.1} parent=0 // pred_check_branch
    %908 = sbr.rel (0) target = $region21
  $region20: #{run_pass.1} parent=0 // pred_region
    _
  $region21: #{run_pass.1} parent=0 // pred_fallthru
    _
  // Predicated region
  $region22: #{run_pass.1} parent=0 // pred_check
    _
  $region23: #{run_pass.1} parent=0 // pred_check_branch
    %910 = sbr.rel (0) target = $region25
  $region24: #{run_pass.1} parent=0 // pred_region
    _
  $region25: #{run_pass.1} parent=0 // pred_fallthru
    _
  // Predicated region
  $region26: #{run_pass.1} parent=0 // pred_check
    _
  $region27: #{run_pass.1} parent=0 // pred_check_branch
    %912 = sbr.rel (0) target = $region29
  $region28: #{run_pass.1} parent=0 // pred_region
    _
  $region29: #{run_pass.1} parent=0 // pred_fallthru
    _
  // Predicated region
  $region30: #{run_pass.1} parent=0 // pred_check
    _
  $region31: #{run_pass.1} parent=0 // pred_check_branch
    %914 = sbr.rel (0) target = $region33
  $region32: #{run_pass.1} parent=0 // pred_region
    _
  $region33: #{run_pass.1} parent=0 // pred_fallthru
    _

// kernel: squeeze.2
$region0: #{squeeze.2}
  %s0 = inlined_call_operand.vmem [shape: f32[256], index: 0, kind: input, shape index: {}]
  %s1 = inlined_call_operand.vmem [shape: f32[4,64], index: 1, kind: output, shape index: {}]
  $region1: #{squeeze.2} parent=0
    #allocation0 [shape = 'u8[4096]{0}', space=vmem, size = 0x1000, scoped, tag = 'scoped mem for output reshape']
    #allocation1 [shape = 'u8[4096]{0}', space=vmem, size = 0x1000, scoped, tag = 'scoped mem for input reshape']
    %s3 = sshllo.u32 0, 2
    %v4 = vld [vmem:[%s0] sm:%s3]
    %5 = vst [vmem:[#allocation1] sm:%s3] %v4
    %v6 = vld [vmem:[#allocation1] sm:$0x3]
    %vm7 = vcmask 523264
    %8 = vst.msk [vmem:[#allocation0] ss:$2 sm:$0x3] %vm7, %v6
    %v9 = vld [vmem:[#allocation1] sm:$0x3]
    %10 = vrot.lane.b32.xlu0 %v9, 64
    %v11 = vpop.permute.xlu0 %10
    %vm12 = vcmask 523264
    %s13 = scalar_lea.vmem [#allocation0], 1
    %14 = vst.msk [vmem:[%s13] ss:$2 sm:$0x3] %vm12, %v11
    %s16 = sshllo.u32 0, 4
    %v18 = vld [vmem:[#allocation0] sm:%s16]
    %s19 = sshllo.u32 0, 4
    %20 = vst [vmem:[%s1] sm:%s19] %v18

// kernel: squeeze.3
$region0: #{squeeze.3}
  %s0 = inlined_call_operand.vmem [shape: s32[256], index: 0, kind: input, shape index: {}]
  %s1 = inlined_call_operand.hbm [shape: s32[4,64], index: 1, kind: output, shape index: {}]
  $region1: #{squeeze.3} parent=0
    #allocation0 [shape = 'u8[2048]{0}', space=vmem, size = 0x800, scoped, tag = 'operand span for operand 1']
    #allocation1 [shape = 's32[1]{0}', space=sflag, size = 0x4, scoped, tag = 'scoped memory for squeeze.3']
    #allocation2 [shape = 'u8[4096]{0}', space=vmem, size = 0x1000, scoped, tag = 'scoped mem for output reshape']
    #allocation3 [shape = 'u8[4096]{0}', space=vmem, size = 0x1000, scoped, tag = 'scoped mem for input reshape']
    %2 = vsyncpa [#allocation1], 0
    %s4 = sshllo.u32 0, 2
    %v5 = vld [vmem:[%s0] sm:%s4]
    %6 = vst [vmem:[#allocation3] sm:%s4] %v5
    %v7 = vld [vmem:[#allocation3] sm:$0x3]
    %vm8 = vcmask 523264
    %9 = vst.msk [vmem:[#allocation2] ss:$2 sm:$0x3] %vm8, %v7
    %v10 = vld [vmem:[#allocation3] sm:$0x3]
    %11 = vrot.lane.b32.xlu0 %v10, 64
    %v12 = vpop.permute.xlu0 %11
    %vm13 = vcmask 523264
    %s14 = scalar_lea.vmem [#allocation2], 1
    %15 = vst.msk [vmem:[%s14] ss:$2 sm:$0x3] %vm13, %v12
    %s17 = sshllo.u32 0, 4
    %v19 = vld [vmem:[#allocation2] sm:%s17]
    %s20 = sshllo.u32 0, 4
    %21 = vst [vmem:[#allocation0] sm:%s20] %v19
    %s23 = ssub.s32 64, 64
    %24 = vsyncadd [#allocation1], %s23
    %s26 = sshll.u32 [#allocation0], 4
    %s27 = int_to_ptr.vmem [resolvable:$true] %s26
    %29 = dma.vmem_to_hbm [thread:$0]  %s27, 64, %s1, [#allocation1]
    %30 = dma.done [#allocation1], 64
    %31 = vsyncpa [#allocation1], 1

// kernel: run_pass.1
$region0: #{run_pass.1}
  #allocation0 [shape = 'u32[]', space=smem, size = 0x4, offset = 0x4, fixed_abs, tag = 'smem constant byte address 0x4 - core index']
  #allocation1 [shape = 'u32[144,128]{1,0:T(1,128)}', space=vmem, size = 0x12000, scoped, tag = 'internal scratch']
  %s0 = inlined_call_operand.vmem [shape: f32[256,32], index: 0, kind: input, shape index: {}]
  %s1 = inlined_call_operand.vmem [shape: bf16[128,32], index: 1, kind: input, shape index: {}]
  %s2 = inlined_call_operand.vmem [shape: f32[128,1], index: 2, kind: input, shape index: {}]
  %s3 = inlined_call_operand.vmem [shape: s32[1,256], index: 3, kind: input, shape index: {}]
  %s4 = inlined_call_operand.vmem [shape: f32[1,256], index: 4, kind: output, shape index: {0}]
  %s5 = inlined_call_operand.vmem [shape: s32[1,256], index: 5, kind: output, shape index: {1}]
  %6 = xla_tuple %s4, %s5
  %s7 = sld [smem:[#allocation0]]
  $region34: #{run_pass.1} parent=0
    _
  %s9 = ssub.s32 1, %s7
  %s10 = scalar_select 0, %s9, %s7
  // Predicated region
  $region2: #{run_pass.1} parent=0 // pred_check
    _
  $region3: #{run_pass.1} parent=0 // pred_check_branch
    %12 = sbr.rel (0) target = $region5
  $region4: #{run_pass.1} parent=0 // pred_region
    _
  $region5: #{run_pass.1} parent=0 // pred_fallthru
    _
  // Predicated region
  $region6: #{run_pass.1} parent=0 // pred_check
    _
  $region7: #{run_pass.1} parent=0 // pred_check_branch
    %14 = sbr.rel (0) target = $region9
  $region8: #{run_pass.1} parent=0 // pred_region
    _
  $region9: #{run_pass.1} parent=0 // pred_fallthru
    _
  // Predicated region
  $region10: #{run_pass.1} parent=0 // pred_check
    _
  $region11: #{run_pass.1} parent=0 // pred_check_branch
    %16 = sbr.rel (0) target = $region13
  $region12: #{run_pass.1} parent=0 // pred_region
    _
  $region13: #{run_pass.1} parent=0 // pred_fallthru
    _
  // Predicated region
  $region14: #{run_pass.1} parent=0 // pred_check
    _
  $region15: #{run_pass.1} parent=0 // pred_check_branch
    %18 = sbr.rel (0) target = $region17
  $region16: #{run_pass.1} parent=0 // pred_region
    _
  $region17: #{run_pass.1} parent=0 // pred_fallthru
    _
  %v20 = vld [vmem:[%s0] sm:$0xff]
  %v21 = vld [vmem:[%s0 + $0x8] sm:$0xff]
  %v22 = vld [vmem:[%s0 + $0x10] sm:$0xff]
  %v23 = vld [vmem:[%s0 + $0x18] sm:$0xff]
  %v24 = vld [vmem:[%s0 + $0x20] sm:$0xff]
  %v25 = vld [vmem:[%s0 + $0x28] sm:$0xff]
  %v26 = vld [vmem:[%s0 + $0x30] sm:$0xff]
  %v27 = vld [vmem:[%s0 + $0x38] sm:$0xff]
  %v28 = vld [vmem:[%s0 + $0x40] sm:$0xff]
  %v29 = vld [vmem:[%s0 + $0x48] sm:$0xff]
  %v30 = vld [vmem:[%s0 + $0x50] sm:$0xff]
  %v31 = vld [vmem:[%s0 + $0x58] sm:$0xff]
  %v32 = vld [vmem:[%s0 + $0x60] sm:$0xff]
  %v33 = vld [vmem:[%s0 + $0x68] sm:$0xff]
  %v34 = vld [vmem:[%s0 + $0x70] sm:$0xff]
  %v35 = vld [vmem:[%s0 + $0x78] sm:$0xff]
  %v36 = vld [vmem:[%s0 + $0x80] sm:$0xff]
  %v37 = vld [vmem:[%s0 + $0x88] sm:$0xff]
  %v38 = vld [vmem:[%s0 + $0x90] sm:$0xff]
  %v39 = vld [vmem:[%s0 + $0x98] sm:$0xff]
  %v40 = vld [vmem:[%s0 + $0xa0] sm:$0xff]
  %v41 = vld [vmem:[%s0 + $0xa8] sm:$0xff]
  %v42 = vld [vmem:[%s0 + $0xb0] sm:$0xff]
  %v43 = vld [vmem:[%s0 + $0xb8] sm:$0xff]
  %v44 = vld [vmem:[%s0 + $0xc0] sm:$0xff]
  %v45 = vld [vmem:[%s0 + $0xc8] sm:$0xff]
  %v46 = vld [vmem:[%s0 + $0xd0] sm:$0xff]
  %v47 = vld [vmem:[%s0 + $0xd8] sm:$0xff]
  %v48 = vld [vmem:[%s0 + $0xe0] sm:$0xff]
  %v49 = vld [vmem:[%s0 + $0xe8] sm:$0xff]
  %v50 = vld [vmem:[%s0 + $0xf0] sm:$0xff]
  %v51 = vld [vmem:[%s0 + $0xf8] sm:$0xff]
  %v52 = vpack.c.bf16 %v21, %v20
  %v53 = vpack.c.bf16 %v23, %v22
  %v54 = vpack.c.bf16 %v25, %v24
  %v55 = vpack.c.bf16 %v27, %v26
  %v56 = vpack.c.bf16 %v29, %v28
  %v57 = vpack.c.bf16 %v31, %v30
  %v58 = vpack.c.bf16 %v33, %v32
  %v59 = vpack.c.bf16 %v35, %v34
  %v60 = vpack.c.bf16 %v37, %v36
  %v61 = vpack.c.bf16 %v39, %v38
  %v62 = vpack.c.bf16 %v41, %v40
  %v63 = vpack.c.bf16 %v43, %v42
  %v64 = vpack.c.bf16 %v45, %v44
  %v65 = vpack.c.bf16 %v47, %v46
  %v66 = vpack.c.bf16 %v49, %v48
  %v67 = vpack.c.bf16 %v51, %v50
  %v68 = vld [vmem:[%s1] sm:$0xf]
  %v69 = vld [vmem:[%s1 + $0x4] sm:$0xf]
  %v70 = vld [vmem:[%s1 + $0x8] sm:$0xf]
  %v71 = vld [vmem:[%s1 + $0xc] sm:$0xf]
  %v72 = vld [vmem:[%s1 + $0x10] sm:$0xf]
  %v73 = vld [vmem:[%s1 + $0x14] sm:$0xf]
  %v74 = vld [vmem:[%s1 + $0x18] sm:$0xf]
  %v75 = vld [vmem:[%s1 + $0x1c] sm:$0xf]
  %v76 = vld [vmem:[%s1 + $0x20] sm:$0xf]
  %v77 = vld [vmem:[%s1 + $0x24] sm:$0xf]
  %v78 = vld [vmem:[%s1 + $0x28] sm:$0xf]
  %v79 = vld [vmem:[%s1 + $0x2c] sm:$0xf]
  %v80 = vld [vmem:[%s1 + $0x30] sm:$0xf]
  %v81 = vld [vmem:[%s1 + $0x34] sm:$0xf]
  %v82 = vld [vmem:[%s1 + $0x38] sm:$0xf]
  %v83 = vld [vmem:[%s1 + $0x3c] sm:$0xf]
  %v84 = vld [vmem:[%s2] sm:$0xff]
  %v85 = vld [vmem:[%s2 + $0x8] sm:$0xff]
  %v86 = vld [vmem:[%s2 + $0x10] sm:$0xff]
  %v87 = vld [vmem:[%s2 + $0x18] sm:$0xff]
  %v88 = vld [vmem:[%s2 + $0x20] sm:$0xff]
  %v89 = vld [vmem:[%s2 + $0x28] sm:$0xff]
  %v90 = vld [vmem:[%s2 + $0x30] sm:$0xff]
  %v91 = vld [vmem:[%s2 + $0x38] sm:$0xff]
  %v92 = vld [vmem:[%s2 + $0x40] sm:$0xff]
  %v93 = vld [vmem:[%s2 + $0x48] sm:$0xff]
  %v94 = vld [vmem:[%s2 + $0x50] sm:$0xff]
  %v95 = vld [vmem:[%s2 + $0x58] sm:$0xff]
  %v96 = vld [vmem:[%s2 + $0x60] sm:$0xff]
  %v97 = vld [vmem:[%s2 + $0x68] sm:$0xff]
  %v98 = vld [vmem:[%s2 + $0x70] sm:$0xff]
  %v99 = vld [vmem:[%s2 + $0x78] sm:$0xff]
  %101 = vset.pattern.permute.xlu0 0
  %102 = vperm.xlu0 %101, %v84
  %v103 = vpop.permute.xlu0 %102
  %106 = vset.pattern.permute.xlu0 0
  %107 = vperm.xlu0 %106, %v85
  %v108 = vpop.permute.xlu0 %107
  %111 = vset.pattern.permute.xlu0 0
  %112 = vperm.xlu0 %111, %v86
  %v113 = vpop.permute.xlu0 %112
  %116 = vset.pattern.permute.xlu0 0
  %117 = vperm.xlu0 %116, %v87
  %v118 = vpop.permute.xlu0 %117
  %121 = vset.pattern.permute.xlu0 0
  %122 = vperm.xlu0 %121, %v88
  %v123 = vpop.permute.xlu0 %122
  %126 = vset.pattern.permute.xlu0 0
  %127 = vperm.xlu0 %126, %v89
  %v128 = vpop.permute.xlu0 %127
  %131 = vset.pattern.permute.xlu0 0
  %132 = vperm.xlu0 %131, %v90
  %v133 = vpop.permute.xlu0 %132
  %136 = vset.pattern.permute.xlu0 0
  %137 = vperm.xlu0 %136, %v91
  %v138 = vpop.permute.xlu0 %137
  %141 = vset.pattern.permute.xlu0 0
  %142 = vperm.xlu0 %141, %v92
  %v143 = vpop.permute.xlu0 %142
  %146 = vset.pattern.permute.xlu0 0
  %147 = vperm.xlu0 %146, %v93
  %v148 = vpop.permute.xlu0 %147
  %151 = vset.pattern.permute.xlu0 0
  %152 = vperm.xlu0 %151, %v94
  %v153 = vpop.permute.xlu0 %152
  %156 = vset.pattern.permute.xlu0 0
  %157 = vperm.xlu0 %156, %v95
  %v158 = vpop.permute.xlu0 %157
  %161 = vset.pattern.permute.xlu0 0
  %162 = vperm.xlu0 %161, %v96
  %v163 = vpop.permute.xlu0 %162
  %166 = vset.pattern.permute.xlu0 0
  %167 = vperm.xlu0 %166, %v97
  %v168 = vpop.permute.xlu0 %167
  %171 = vset.pattern.permute.xlu0 0
  %172 = vperm.xlu0 %171, %v98
  %v173 = vpop.permute.xlu0 %172
  %176 = vset.pattern.permute.xlu0 0
  %177 = vperm.xlu0 %176, %v99
  %v178 = vpop.permute.xlu0 %177
  %v196 = vunpack.c.l.b16 %v68
  %v197 = vunpack.c.l.b16 %v69
  %v198 = vunpack.c.l.b16 %v70
  %v199 = vunpack.c.l.b16 %v71
  %v200 = vunpack.c.l.b16 %v72
  %v201 = vunpack.c.l.b16 %v73
  %v202 = vunpack.c.l.b16 %v74
  %v203 = vunpack.c.l.b16 %v75
  %v204 = vunpack.c.l.b16 %v76
  %v205 = vunpack.c.l.b16 %v77
  %v206 = vunpack.c.l.b16 %v78
  %v207 = vunpack.c.l.b16 %v79
  %v208 = vunpack.c.l.b16 %v80
  %v209 = vunpack.c.l.b16 %v81
  %v210 = vunpack.c.l.b16 %v82
  %v211 = vunpack.c.l.b16 %v83
  %v212 = vpack.c.b16 %v197, %v196
  %v213 = vpack.c.b16 %v199, %v198
  %v214 = vpack.c.b16 %v201, %v200
  %v215 = vpack.c.b16 %v203, %v202
  %v216 = vpack.c.b16 %v205, %v204
  %v217 = vpack.c.b16 %v207, %v206
  %v218 = vpack.c.b16 %v209, %v208
  %v219 = vpack.c.b16 %v211, %v210
  %vm220 = vcmask 261120
  %v222 = vsel %vm220, %v212, 0
  %v225 = vsel %vm220, %v213, 0
  %v228 = vsel %vm220, %v214, 0
  %v231 = vsel %vm220, %v215, 0
  %v234 = vsel %vm220, %v216, 0
  %v237 = vsel %vm220, %v217, 0
  %v240 = vsel %vm220, %v218, 0
  %v243 = vsel %vm220, %v219, 0
  %v246 = vsel %vm220, %v52, 0
  %v249 = vsel %vm220, %v53, 0
  %v252 = vsel %vm220, %v54, 0
  %v255 = vsel %vm220, %v55, 0
  %v258 = vsel %vm220, %v56, 0
  %v261 = vsel %vm220, %v57, 0
  %v264 = vsel %vm220, %v58, 0
  %v267 = vsel %vm220, %v59, 0
  %v270 = vsel %vm220, %v60, 0
  %v273 = vsel %vm220, %v61, 0
  %v276 = vsel %vm220, %v62, 0
  %v279 = vsel %vm220, %v63, 0
  %v282 = vsel %vm220, %v64, 0
  %v285 = vsel %vm220, %v65, 0
  %v288 = vsel %vm220, %v66, 0
  %v291 = vsel %vm220, %v67, 0
  %293 = vmatprep.subr.bf16.mxu0 0
  %294 = vmatpush1.bf16.xpose.msra.mxu0 %v246
  %295 = vmatprep.subr.bf16.mxu0 0
  %296 = vmatpush1.bf16.xpose.msra.mxu0 %v249
  %297 = vmatprep.subr.bf16.mxu0 0
  %298 = vmatpush1.bf16.xpose.msra.mxu0 %v252
  %299 = vmatprep.subr.bf16.mxu0 0
  %300 = vmatpush1.bf16.xpose.msra.mxu0 %v255
  %301 = vmatprep.subr.bf16.mxu0 0
  %302 = vmatpush1.bf16.xpose.msra.mxu0 %v258
  %303 = vmatprep.subr.bf16.mxu0 0
  %304 = vmatpush1.bf16.xpose.msra.mxu0 %v261
  %305 = vmatprep.subr.bf16.mxu0 0
  %306 = vmatpush1.bf16.xpose.msra.mxu0 %v264
  %307 = vmatprep.subr.bf16.mxu0 0
  %308 = vmatpush1.bf16.xpose.msra.mxu0 %v267
  %309 = vmatprep.subr.bf16.mxu0 0
  %310 = vmatpush1.bf16.xpose.msra.mxu0 %v270
  %311 = vmatprep.subr.bf16.mxu0 0
  %312 = vmatpush1.bf16.xpose.msra.mxu0 %v273
  %313 = vmatprep.subr.bf16.mxu0 0
  %314 = vmatpush1.bf16.xpose.msra.mxu0 %v276
  %315 = vmatprep.subr.bf16.mxu0 0
  %316 = vmatpush1.bf16.xpose.msra.mxu0 %v279
  %317 = vmatprep.subr.bf16.mxu0 0
  %318 = vmatpush1.bf16.xpose.msra.mxu0 %v282
  %319 = vmatprep.subr.bf16.mxu0 0
  %320 = vmatpush1.bf16.xpose.msra.mxu0 %v285
  %321 = vmatprep.subr.bf16.mxu0 0
  %322 = vmatpush1.bf16.xpose.msra.mxu0 %v288
  %323 = vmatprep.subr.bf16.mxu0 0
  %324 = vmatpush1.bf16.xpose.msra.mxu0 %v291
  %325 = vmatprep.mubr.bf16.mxu0 0
  %326 = vmatmul.mubr.bf16.gmra.mrb[0].mxu0 %v222
  %v327 = vpop.f32.mrb[0].mxu0
  %v328 = vadd.f32 %v103, %v327
  %v329 = vpop.f32.mrb[0].mxu0
  %v330 = vadd.f32 %v103, %v329
  %v331 = vpop.f32.mrb[0].mxu0
  %v332 = vadd.f32 %v108, %v331
  %v333 = vpop.f32.mrb[0].mxu0
  %v334 = vadd.f32 %v108, %v333
  %335 = vmatprep.mubr.bf16.mxu0 0
  %336 = vmatmul.mubr.bf16.gmra.mrb[0].mxu0 %v225
  %v337 = vpop.f32.mrb[0].mxu0
  %v338 = vadd.f32 %v113, %v337
  %v339 = vpop.f32.mrb[0].mxu0
  %v340 = vadd.f32 %v113, %v339
  %v341 = vpop.f32.mrb[0].mxu0
  %v342 = vadd.f32 %v118, %v341
  %v343 = vpop.f32.mrb[0].mxu0
  %v344 = vadd.f32 %v118, %v343
  %345 = vmatprep.mubr.bf16.mxu0 0
  %346 = vmatmul.mubr.bf16.gmra.mrb[0].mxu0 %v228
  %v347 = vpop.f32.mrb[0].mxu0
  %v348 = vadd.f32 %v123, %v347
  %v349 = vpop.f32.mrb[0].mxu0
  %v350 = vadd.f32 %v123, %v349
  %v351 = vpop.f32.mrb[0].mxu0
  %v352 = vadd.f32 %v128, %v351
  %v353 = vpop.f32.mrb[0].mxu0
  %v354 = vadd.f32 %v128, %v353
  %355 = vmatprep.mubr.bf16.mxu0 0
  %356 = vmatmul.mubr.bf16.gmra.mrb[0].mxu0 %v231
  %v357 = vpop.f32.mrb[0].mxu0
  %v358 = vadd.f32 %v133, %v357
  %v359 = vpop.f32.mrb[0].mxu0
  %v360 = vadd.f32 %v133, %v359
  %v361 = vpop.f32.mrb[0].mxu0
  %v362 = vadd.f32 %v138, %v361
  %v363 = vpop.f32.mrb[0].mxu0
  %v364 = vadd.f32 %v138, %v363
  %365 = vmatprep.mubr.bf16.mxu0 0
  %366 = vmatmul.mubr.bf16.gmra.mrb[0].mxu0 %v234
  %v367 = vpop.f32.mrb[0].mxu0
  %v368 = vadd.f32 %v143, %v367
  %v369 = vpop.f32.mrb[0].mxu0
  %v370 = vadd.f32 %v143, %v369
  %v371 = vpop.f32.mrb[0].mxu0
  %v372 = vadd.f32 %v148, %v371
  %v373 = vpop.f32.mrb[0].mxu0
  %v374 = vadd.f32 %v148, %v373
  %375 = vmatprep.mubr.bf16.mxu0 0
  %376 = vmatmul.mubr.bf16.gmra.mrb[0].mxu0 %v237
  %v377 = vpop.f32.mrb[0].mxu0
  %v378 = vadd.f32 %v153, %v377
  %v379 = vpop.f32.mrb[0].mxu0
  %v380 = vadd.f32 %v153, %v379
  %v381 = vpop.f32.mrb[0].mxu0
  %v382 = vadd.f32 %v158, %v381
  %v383 = vpop.f32.mrb[0].mxu0
  %v384 = vadd.f32 %v158, %v383
  %385 = vmatprep.mubr.bf16.mxu0 0
  %386 = vmatmul.mubr.bf16.gmra.mrb[0].mxu0 %v240
  %v387 = vpop.f32.mrb[0].mxu0
  %v388 = vadd.f32 %v163, %v387
  %v389 = vpop.f32.mrb[0].mxu0
  %v390 = vadd.f32 %v163, %v389
  %v391 = vpop.f32.mrb[0].mxu0
  %v392 = vadd.f32 %v168, %v391
  %v393 = vpop.f32.mrb[0].mxu0
  %v394 = vadd.f32 %v168, %v393
  %395 = vmatprep.mubr.bf16.mxu0 0
  %396 = vmatmul.mubr.bf16.gmra.mrb[0].mxu0 %v243
  %v397 = vpop.f32.mrb[0].mxu0
  %v398 = vadd.f32 %v173, %v397
  %v399 = vpop.f32.mrb[0].mxu0
  %v400 = vadd.f32 %v173, %v399
  %v401 = vpop.f32.mrb[0].mxu0
  %v402 = vadd.f32 %v178, %v401
  %v403 = vpop.f32.mrb[0].mxu0
  %v404 = vadd.f32 %v178, %v403
  %405 = vdwg.mxu0
  %v406 = vld [vmem:[%s3] sm:$0x3]
  %v407 = vlaneseq
  %v408 = vshrl.u32 %v407, 7
  %v409 = vadd.s32 %v408, 8
  %v410 = vadd.s32 %v408, 16
  %v411 = vadd.s32 %v408, 24
  %v412 = vadd.s32 %v408, 32
  %v413 = vadd.s32 %v408, 40
  %v414 = vadd.s32 %v408, 48
  %v415 = vadd.s32 %v408, 56
  %v416 = vadd.s32 %v408, 64
  %v417 = vadd.s32 %v408, 72
  %v418 = vadd.s32 %v408, 80
  %v419 = vadd.s32 %v408, 88
  %v420 = vadd.s32 %v408, 96
  %v421 = vadd.s32 %v408, 104
  %v422 = vadd.s32 %v408, 112
  %v423 = vadd.s32 %v408, 120
  %v424 = vmax.f32 %v328, %v338
  %v425 = vmax.f32 %v332, %v342
  %v426 = vmax.f32 %v424, %v348
  %v427 = vmax.f32 %v425, %v352
  %v428 = vmax.f32 %v426, %v358
  %v429 = vmax.f32 %v427, %v362
  %v430 = vmax.f32 %v428, %v368
  %v431 = vmax.f32 %v429, %v372
  %v432 = vmax.f32 %v430, %v378
  %v433 = vmax.f32 %v431, %v382
  %v434 = vmax.f32 %v432, %v388
  %v435 = vmax.f32 %v433, %v392
  %v436 = vmax.f32 %v434, %v398
  %v437 = vmax.f32 %v435, %v402
  %v438 = vmax.f32 %v436, %v437
  %v439 = vrot.slane %v438, 4
  %v440 = vmax.f32 %v438, %v439
  %v441 = vrot.slane %v440, 2
  %v442 = vmax.f32 %v440, %v441
  %v443 = vrot.slane %v442, 1
  %v444 = vmax.f32 %v442, %v443
  %v445 = vmax.f32 %v330, %v340
  %v446 = vmax.f32 %v334, %v344
  %v447 = vmax.f32 %v445, %v350
  %v448 = vmax.f32 %v446, %v354
  %v449 = vmax.f32 %v447, %v360
  %v450 = vmax.f32 %v448, %v364
  %v451 = vmax.f32 %v449, %v370
  %v452 = vmax.f32 %v450, %v374
  %v453 = vmax.f32 %v451, %v380
  %v454 = vmax.f32 %v452, %v384
  %v455 = vmax.f32 %v453, %v390
  %v456 = vmax.f32 %v454, %v394
  %v457 = vmax.f32 %v455, %v400
  %v458 = vmax.f32 %v456, %v404
  %v459 = vmax.f32 %v457, %v458
  %v460 = vrot.slane %v459, 4
  %v461 = vmax.f32 %v459, %v460
  %v462 = vrot.slane %v461, 2
  %v463 = vmax.f32 %v461, %v462
  %v464 = vrot.slane %v463, 1
  %v465 = vmax.f32 %v463, %v464
  %v466 = vsub.f32 %v328, %v444
  %v467 = vsub.f32 %v330, %v465
  %v468 = vsub.f32 %v332, %v444
  %v469 = vsub.f32 %v334, %v465
  %v470 = vsub.f32 %v338, %v444
  %v471 = vsub.f32 %v340, %v465
  %v472 = vsub.f32 %v342, %v444
  %v473 = vsub.f32 %v344, %v465
  %v474 = vsub.f32 %v348, %v444
  %v475 = vsub.f32 %v350, %v465
  %v476 = vsub.f32 %v352, %v444
  %v477 = vsub.f32 %v354, %v465
  %v478 = vsub.f32 %v358, %v444
  %v479 = vsub.f32 %v360, %v465
  %v480 = vsub.f32 %v362, %v444
  %v481 = vsub.f32 %v364, %v465
  %v482 = vsub.f32 %v368, %v444
  %v483 = vsub.f32 %v370, %v465
  %v484 = vsub.f32 %v372, %v444
  %v485 = vsub.f32 %v374, %v465
  %v486 = vsub.f32 %v378, %v444
  %v487 = vsub.f32 %v380, %v465
  %v488 = vsub.f32 %v382, %v444
  %v489 = vsub.f32 %v384, %v465
  %v490 = vsub.f32 %v388, %v444
  %v491 = vsub.f32 %v390, %v465
  %v492 = vsub.f32 %v392, %v444
  %v493 = vsub.f32 %v394, %v465
  %v494 = vsub.f32 %v398, %v444
  %v495 = vsub.f32 %v400, %v465
  %v496 = vsub.f32 %v402, %v444
  %v497 = vsub.f32 %v404, %v465
  %v498 = vmul.f32 %v466, 1.442695
  %v499 = vpow.pop %v498
  %v500 = vmul.f32 %v467, 1.442695
  %v501 = vpow.pop %v500
  %v502 = vmul.f32 %v468, 1.442695
  %v503 = vpow.pop %v502
  %v504 = vmul.f32 %v469, 1.442695
  %v505 = vpow.pop %v504
  %v506 = vmul.f32 %v470, 1.442695
  %v507 = vpow.pop %v506
  %v508 = vmul.f32 %v471, 1.442695
  %v509 = vpow.pop %v508
  %v510 = vmul.f32 %v472, 1.442695
  %v511 = vpow.pop %v510
  %v512 = vmul.f32 %v473, 1.442695
  %v513 = vpow.pop %v512
  %v514 = vmul.f32 %v474, 1.442695
  %v515 = vpow.pop %v514
  %v516 = vmul.f32 %v475, 1.442695
  %v517 = vpow.pop %v516
  %v518 = vmul.f32 %v476, 1.442695
  %v519 = vpow.pop %v518
  %v520 = vmul.f32 %v477, 1.442695
  %v521 = vpow.pop %v520
  %v522 = vmul.f32 %v478, 1.442695
  %v523 = vpow.pop %v522
  %v524 = vmul.f32 %v479, 1.442695
  %v525 = vpow.pop %v524
  %v526 = vmul.f32 %v480, 1.442695
  %v527 = vpow.pop %v526
  %v528 = vmul.f32 %v481, 1.442695
  %v529 = vpow.pop %v528
  %v530 = vmul.f32 %v482, 1.442695
  %v531 = vpow.pop %v530
  %v532 = vmul.f32 %v483, 1.442695
  %v533 = vpow.pop %v532
  %v534 = vmul.f32 %v484, 1.442695
  %v535 = vpow.pop %v534
  %v536 = vmul.f32 %v485, 1.442695
  %v537 = vpow.pop %v536
  %v538 = vmul.f32 %v486, 1.442695
  %v539 = vpow.pop %v538
  %v540 = vmul.f32 %v487, 1.442695
  %v541 = vpow.pop %v540
  %v542 = vmul.f32 %v488, 1.442695
  %v543 = vpow.pop %v542
  %v544 = vmul.f32 %v489, 1.442695
  %v545 = vpow.pop %v544
  %v546 = vmul.f32 %v490, 1.442695
  %v547 = vpow.pop %v546
  %v548 = vmul.f32 %v491, 1.442695
  %v549 = vpow.pop %v548
  %v550 = vmul.f32 %v492, 1.442695
  %v551 = vpow.pop %v550
  %v552 = vmul.f32 %v493, 1.442695
  %v553 = vpow.pop %v552
  %v554 = vmul.f32 %v494, 1.442695
  %v555 = vpow.pop %v554
  %v556 = vmul.f32 %v495, 1.442695
  %v557 = vpow.pop %v556
  %v558 = vmul.f32 %v496, 1.442695
  %v559 = vpow.pop %v558
  %v560 = vmul.f32 %v497, 1.442695
  %v561 = vpow.pop %v560
  %v562 = vadd.f32 %v499, %v503
  %v563 = vadd.f32 %v562, %v507
  %v564 = vadd.f32 %v563, %v511
  %v565 = vadd.f32 %v564, %v515
  %v566 = vadd.f32 %v565, %v519
  %v567 = vadd.f32 %v566, %v523
  %v568 = vadd.f32 %v567, %v527
  %v569 = vadd.f32 %v568, %v531
  %v570 = vadd.f32 %v569, %v535
  %v571 = vadd.f32 %v570, %v539
  %v572 = vadd.f32 %v571, %v543
  %v573 = vadd.f32 %v572, %v547
  %v574 = vadd.f32 %v573, %v551
  %v575 = vadd.f32 %v574, %v555
  %v576 = vadd.f32 %v575, %v559
  %v577 = vrot.slane %v576, 4
  %v578 = vadd.f32 %v576, %v577
  %v579 = vrot.slane %v578, 2
  %v580 = vadd.f32 %v578, %v579
  %v581 = vrot.slane %v580, 1
  %v582 = vadd.f32 %v580, %v581
  %v583 = vadd.f32 %v501, %v505
  %v584 = vadd.f32 %v583, %v509
  %v585 = vadd.f32 %v584, %v513
  %v586 = vadd.f32 %v585, %v517
  %v587 = vadd.f32 %v586, %v521
  %v588 = vadd.f32 %v587, %v525
  %v589 = vadd.f32 %v588, %v529
  %v590 = vadd.f32 %v589, %v533
  %v591 = vadd.f32 %v590, %v537
  %v592 = vadd.f32 %v591, %v541
  %v593 = vadd.f32 %v592, %v545
  %v594 = vadd.f32 %v593, %v549
  %v595 = vadd.f32 %v594, %v553
  %v596 = vadd.f32 %v595, %v557
  %v597 = vadd.f32 %v596, %v561
  %v598 = vrot.slane %v597, 4
  %v599 = vadd.f32 %v597, %v598
  %v600 = vrot.slane %v599, 2
  %v601 = vadd.f32 %v599, %v600
  %v602 = vrot.slane %v601, 1
  %v603 = vadd.f32 %v601, %v602
  %v604 = vlog2.pop %v582
  %v605 = vmul.f32 %v604, 0.6931472
  %v606 = vlog2.pop %v603
  %v607 = vmul.f32 %v606, 0.6931472
  %v608 = vadd.f32 %v444, %v605
  %v609 = vadd.f32 %v465, %v607
  %v610 = vlaneseq
  %v611 = vshrl.u32 %v610, 7
  %v612 = vsub.s32 0, %v611
  %v613 = vrot.slane %v406, %v612
  %v614 = vlaneseq
  %v615 = vshrl.u32 %v614, 7
  %v616 = vsub.s32 1, %v615
  %v617 = vrot.slane %v406, %v616
  %vm618 = vcmp.eq.s32.totalorder %v408, %v613
  %vm619 = vcmp.eq.s32.totalorder %v408, %v617
  %vm620 = vcmp.eq.s32.totalorder %v409, %v613
  %vm621 = vcmp.eq.s32.totalorder %v409, %v617
  %vm622 = vcmp.eq.s32.totalorder %v410, %v613
  %vm623 = vcmp.eq.s32.totalorder %v410, %v617
  %vm624 = vcmp.eq.s32.totalorder %v411, %v613
  %vm625 = vcmp.eq.s32.totalorder %v411, %v617
  %vm626 = vcmp.eq.s32.totalorder %v412, %v613
  %vm627 = vcmp.eq.s32.totalorder %v412, %v617
  %vm628 = vcmp.eq.s32.totalorder %v413, %v613
  %vm629 = vcmp.eq.s32.totalorder %v413, %v617
  %vm630 = vcmp.eq.s32.totalorder %v414, %v613
  %vm631 = vcmp.eq.s32.totalorder %v414, %v617
  %vm632 = vcmp.eq.s32.totalorder %v415, %v613
  %vm633 = vcmp.eq.s32.totalorder %v415, %v617
  %vm634 = vcmp.eq.s32.totalorder %v416, %v613
  %vm635 = vcmp.eq.s32.totalorder %v416, %v617
  %vm636 = vcmp.eq.s32.totalorder %v417, %v613
  %vm637 = vcmp.eq.s32.totalorder %v417, %v617
  %vm638 = vcmp.eq.s32.totalorder %v418, %v613
  %vm639 = vcmp.eq.s32.totalorder %v418, %v617
  %vm640 = vcmp.eq.s32.totalorder %v419, %v613
  %vm641 = vcmp.eq.s32.totalorder %v419, %v617
  %vm642 = vcmp.eq.s32.totalorder %v420, %v613
  %vm643 = vcmp.eq.s32.totalorder %v420, %v617
  %vm644 = vcmp.eq.s32.totalorder %v421, %v613
  %vm645 = vcmp.eq.s32.totalorder %v421, %v617
  %vm646 = vcmp.eq.s32.totalorder %v422, %v613
  %vm647 = vcmp.eq.s32.totalorder %v422, %v617
  %vm648 = vcmp.eq.s32.totalorder %v423, %v613
  %vm649 = vcmp.eq.s32.totalorder %v423, %v617
  %v650 = vsel %vm618, %v328, 0.0
  %v651 = vsel %vm619, %v330, 0.0
  %v652 = vsel %vm620, %v332, 0.0
  %v653 = vsel %vm621, %v334, 0.0
  %v654 = vsel %vm622, %v338, 0.0
  %v655 = vsel %vm623, %v340, 0.0
  %v656 = vsel %vm624, %v342, 0.0
  %v657 = vsel %vm625, %v344, 0.0
  %v658 = vsel %vm626, %v348, 0.0
  %v659 = vsel %vm627, %v350, 0.0
  %v660 = vsel %vm628, %v352, 0.0
  %v661 = vsel %vm629, %v354, 0.0
  %v662 = vsel %vm630, %v358, 0.0
  %v663 = vsel %vm631, %v360, 0.0
  %v664 = vsel %vm632, %v362, 0.0
  %v665 = vsel %vm633, %v364, 0.0
  %v666 = vsel %vm634, %v368, 0.0
  %v667 = vsel %vm635, %v370, 0.0
  %v668 = vsel %vm636, %v372, 0.0
  %v669 = vsel %vm637, %v374, 0.0
  %v670 = vsel %vm638, %v378, 0.0
  %v671 = vsel %vm639, %v380, 0.0
  %v672 = vsel %vm640, %v382, 0.0
  %v673 = vsel %vm641, %v384, 0.0
  %v674 = vsel %vm642, %v388, 0.0
  %v675 = vsel %vm643, %v390, 0.0
  %v676 = vsel %vm644, %v392, 0.0
  %v677 = vsel %vm645, %v394, 0.0
  %v678 = vsel %vm646, %v398, 0.0
  %v679 = vsel %vm647, %v400, 0.0
  %v680 = vsel %vm648, %v402, 0.0
  %v681 = vsel %vm649, %v404, 0.0
  %v682 = vadd.f32 %v650, %v652
  %v683 = vadd.f32 %v682, %v654
  %v684 = vadd.f32 %v683, %v656
  %v685 = vadd.f32 %v684, %v658
  %v686 = vadd.f32 %v685, %v660
  %v687 = vadd.f32 %v686, %v662
  %v688 = vadd.f32 %v687, %v664
  %v689 = vadd.f32 %v688, %v666
  %v690 = vadd.f32 %v689, %v668
  %v691 = vadd.f32 %v690, %v670
  %v692 = vadd.f32 %v691, %v672
  %v693 = vadd.f32 %v692, %v674
  %v694 = vadd.f32 %v693, %v676
  %v695 = vadd.f32 %v694, %v678
  %v696 = vadd.f32 %v695, %v680
  %v697 = vrot.slane %v696, 4
  %v698 = vadd.f32 %v696, %v697
  %v699 = vrot.slane %v698, 2
  %v700 = vadd.f32 %v698, %v699
  %v701 = vrot.slane %v700, 1
  %v702 = vadd.f32 %v700, %v701
  %v703 = vadd.f32 %v651, %v653
  %v704 = vadd.f32 %v703, %v655
  %v705 = vadd.f32 %v704, %v657
  %v706 = vadd.f32 %v705, %v659
  %v707 = vadd.f32 %v706, %v661
  %v708 = vadd.f32 %v707, %v663
  %v709 = vadd.f32 %v708, %v665
  %v710 = vadd.f32 %v709, %v667
  %v711 = vadd.f32 %v710, %v669
  %v712 = vadd.f32 %v711, %v671
  %v713 = vadd.f32 %v712, %v673
  %v714 = vadd.f32 %v713, %v675
  %v715 = vadd.f32 %v714, %v677
  %v716 = vadd.f32 %v715, %v679
  %v717 = vadd.f32 %v716, %v681
  %v718 = vrot.slane %v717, 4
  %v719 = vadd.f32 %v717, %v718
  %v720 = vrot.slane %v719, 2
  %v721 = vadd.f32 %v719, %v720
  %v722 = vrot.slane %v721, 1
  %v723 = vadd.f32 %v721, %v722
  %v724 = vsub.f32 %v608, %v702
  %v725 = vsub.f32 %v609, %v723
  %v728 = vcombine.low %v724, %v725
  %v730 = vunpack.c.l.s4 1966171168
  %v731 = vunpack.c.0.s8 %v730
  %v732 = vlaneseq
  %v733 = vshrl.u32 %v732, 7
  %v734 = vsub.s32 %v731, %v733
  %v735 = vrot.slane %v728, %v734
  %v737 = vunpack.c.l.s4 1966171168
  %v738 = vunpack.c.0.s8 %v737
  %v739 = vlaneseq
  %v740 = vshrl.u32 %v739, 7
  %v741 = vsub.s32 %v738, %v740
  %v742 = vrot.slane %v735, %v741
  %v744 = vlaneseq
  %vm745 = vcmp.ge.s32.totalorder %v744, 0
  %vm746 = vcmp.lt.s32.totalorder %v744, 256
  %vm747 = vmand %vm745, %vm746
  %748 = vst.msk [vmem:[%s4] sm:$0x3] %vm747, %v742
  %vm749 = vcmp.eq.f32.partialorder %v328, %v444
  %vm750 = vcmp.eq.f32.partialorder %v330, %v465
  %vm751 = vcmp.eq.f32.partialorder %v332, %v444
  %vm752 = vcmp.eq.f32.partialorder %v334, %v465
  %vm753 = vcmp.eq.f32.partialorder %v338, %v444
  %vm754 = vcmp.eq.f32.partialorder %v340, %v465
  %vm755 = vcmp.eq.f32.partialorder %v342, %v444
  %vm756 = vcmp.eq.f32.partialorder %v344, %v465
  %vm757 = vcmp.eq.f32.partialorder %v348, %v444
  %vm758 = vcmp.eq.f32.partialorder %v350, %v465
  %vm759 = vcmp.eq.f32.partialorder %v352, %v444
  %vm760 = vcmp.eq.f32.partialorder %v354, %v465
  %vm761 = vcmp.eq.f32.partialorder %v358, %v444
  %vm762 = vcmp.eq.f32.partialorder %v360, %v465
  %vm763 = vcmp.eq.f32.partialorder %v362, %v444
  %vm764 = vcmp.eq.f32.partialorder %v364, %v465
  %vm765 = vcmp.eq.f32.partialorder %v368, %v444
  %vm766 = vcmp.eq.f32.partialorder %v370, %v465
  %vm767 = vcmp.eq.f32.partialorder %v372, %v444
  %vm768 = vcmp.eq.f32.partialorder %v374, %v465
  %vm769 = vcmp.eq.f32.partialorder %v378, %v444
  %vm770 = vcmp.eq.f32.partialorder %v380, %v465
  %vm771 = vcmp.eq.f32.partialorder %v382, %v444
  %vm772 = vcmp.eq.f32.partialorder %v384, %v465
  %vm773 = vcmp.eq.f32.partialorder %v388, %v444
  %vm774 = vcmp.eq.f32.partialorder %v390, %v465
  %vm775 = vcmp.eq.f32.partialorder %v392, %v444
  %vm776 = vcmp.eq.f32.partialorder %v394, %v465
  %vm777 = vcmp.eq.f32.partialorder %v398, %v444
  %vm778 = vcmp.eq.f32.partialorder %v400, %v465
  %vm779 = vcmp.eq.f32.partialorder %v402, %v444
  %vm780 = vcmp.eq.f32.partialorder %v404, %v465
  %v781 = vsel %vm749, %v408, 128
  %v782 = vsel %vm750, %v408, 128
  %v783 = vsel %vm751, %v409, 128
  %v784 = vsel %vm752, %v409, 128
  %v785 = vsel %vm753, %v410, 128
  %v786 = vsel %vm754, %v410, 128
  %v787 = vsel %vm755, %v411, 128
  %v788 = vsel %vm756, %v411, 128
  %v789 = vsel %vm757, %v412, 128
  %v790 = vsel %vm758, %v412, 128
  %v791 = vsel %vm759, %v413, 128
  %v792 = vsel %vm760, %v413, 128
  %v793 = vsel %vm761, %v414, 128
  %v794 = vsel %vm762, %v414, 128
  %v795 = vsel %vm763, %v415, 128
  %v796 = vsel %vm764, %v415, 128
  %v797 = vsel %vm765, %v416, 128
  %v798 = vsel %vm766, %v416, 128
  %v799 = vsel %vm767, %v417, 128
  %v800 = vsel %vm768, %v417, 128
  %v801 = vsel %vm769, %v418, 128
  %v802 = vsel %vm770, %v418, 128
  %v803 = vsel %vm771, %v419, 128
  %v804 = vsel %vm772, %v419, 128
  %v805 = vsel %vm773, %v420, 128
  %v806 = vsel %vm774, %v420, 128
  %v807 = vsel %vm775, %v421, 128
  %v808 = vsel %vm776, %v421, 128
  %v809 = vsel %vm777, %v422, 128
  %v810 = vsel %vm778, %v422, 128
  %v811 = vsel %vm779, %v423, 128
  %v812 = vsel %vm780, %v423, 128
  %vm813 = vcmp.lt.s32.totalorder %v781, %v785
  %v814 = vsel %vm813, %v781, %v785
  %vm815 = vcmp.lt.s32.totalorder %v783, %v787
  %v816 = vsel %vm815, %v783, %v787
  %vm817 = vcmp.lt.s32.totalorder %v814, %v789
  %v818 = vsel %vm817, %v814, %v789
  %vm819 = vcmp.lt.s32.totalorder %v816, %v791
  %v820 = vsel %vm819, %v816, %v791
  %vm821 = vcmp.lt.s32.totalorder %v818, %v793
  %v822 = vsel %vm821, %v818, %v793
  %vm823 = vcmp.lt.s32.totalorder %v820, %v795
  %v824 = vsel %vm823, %v820, %v795
  %vm825 = vcmp.lt.s32.totalorder %v822, %v797
  %v826 = vsel %vm825, %v822, %v797
  %vm827 = vcmp.lt.s32.totalorder %v824, %v799
  %v828 = vsel %vm827, %v824, %v799
  %vm829 = vcmp.lt.s32.totalorder %v826, %v801
  %v830 = vsel %vm829, %v826, %v801
  %vm831 = vcmp.lt.s32.totalorder %v828, %v803
  %v832 = vsel %vm831, %v828, %v803
  %vm833 = vcmp.lt.s32.totalorder %v830, %v805
  %v834 = vsel %vm833, %v830, %v805
  %vm835 = vcmp.lt.s32.totalorder %v832, %v807
  %v836 = vsel %vm835, %v832, %v807
  %vm837 = vcmp.lt.s32.totalorder %v834, %v809
  %v838 = vsel %vm837, %v834, %v809
  %vm839 = vcmp.lt.s32.totalorder %v836, %v811
  %v840 = vsel %vm839, %v836, %v811
  %vm841 = vcmp.lt.s32.totalorder %v838, %v840
  %v842 = vsel %vm841, %v838, %v840
  %v843 = vrot.slane %v842, 4
  %vm844 = vcmp.lt.s32.totalorder %v842, %v843
  %v845 = vsel %vm844, %v842, %v843
  %v846 = vrot.slane %v845, 2
  %vm847 = vcmp.lt.s32.totalorder %v845, %v846
  %v848 = vsel %vm847, %v845, %v846
  %v849 = vrot.slane %v848, 1
  %vm850 = vcmp.lt.s32.totalorder %v848, %v849
  %v851 = vsel %vm850, %v848, %v849
  %vm852 = vcmp.lt.s32.totalorder %v782, %v786
  %v853 = vsel %vm852, %v782, %v786
  %vm854 = vcmp.lt.s32.totalorder %v784, %v788
  %v855 = vsel %vm854, %v784, %v788
  %vm856 = vcmp.lt.s32.totalorder %v853, %v790
  %v857 = vsel %vm856, %v853, %v790
  %vm858 = vcmp.lt.s32.totalorder %v855, %v792
  %v859 = vsel %vm858, %v855, %v792
  %vm860 = vcmp.lt.s32.totalorder %v857, %v794
  %v861 = vsel %vm860, %v857, %v794
  %vm862 = vcmp.lt.s32.totalorder %v859, %v796
  %v863 = vsel %vm862, %v859, %v796
  %vm864 = vcmp.lt.s32.totalorder %v861, %v798
  %v865 = vsel %vm864, %v861, %v798
  %vm866 = vcmp.lt.s32.totalorder %v863, %v800
  %v867 = vsel %vm866, %v863, %v800
  %vm868 = vcmp.lt.s32.totalorder %v865, %v802
  %v869 = vsel %vm868, %v865, %v802
  %vm870 = vcmp.lt.s32.totalorder %v867, %v804
  %v871 = vsel %vm870, %v867, %v804
  %vm872 = vcmp.lt.s32.totalorder %v869, %v806
  %v873 = vsel %vm872, %v869, %v806
  %vm874 = vcmp.lt.s32.totalorder %v871, %v808
  %v875 = vsel %vm874, %v871, %v808
  %vm876 = vcmp.lt.s32.totalorder %v873, %v810
  %v877 = vsel %vm876, %v873, %v810
  %vm878 = vcmp.lt.s32.totalorder %v875, %v812
  %v879 = vsel %vm878, %v875, %v812
  %vm880 = vcmp.lt.s32.totalorder %v877, %v879
  %v881 = vsel %vm880, %v877, %v879
  %v882 = vrot.slane %v881, 4
  %vm883 = vcmp.lt.s32.totalorder %v881, %v882
  %v884 = vsel %vm883, %v881, %v882
  %v885 = vrot.slane %v884, 2
  %vm886 = vcmp.lt.s32.totalorder %v884, %v885
  %v887 = vsel %vm886, %v884, %v885
  %v888 = vrot.slane %v887, 1
  %vm889 = vcmp.lt.s32.totalorder %v887, %v888
  %v890 = vsel %vm889, %v887, %v888
  %v891 = vcombine.low %v851, %v890
  %v893 = vunpack.c.l.s4 1966171168
  %v894 = vunpack.c.0.s8 %v893
  %v895 = vlaneseq
  %v896 = vshrl.u32 %v895, 7
  %v897 = vsub.s32 %v894, %v896
  %v898 = vrot.slane %v891, %v897
  %v900 = vunpack.c.l.s4 1966171168
  %v901 = vunpack.c.0.s8 %v900
  %v902 = vlaneseq
  %v903 = vshrl.u32 %v902, 7
  %v904 = vsub.s32 %v901, %v903
  %v905 = vrot.slane %v898, %v904
  %906 = vst.msk [vmem:[%s5] sm:$0x3] %vm747, %v905
  // Predicated region
  $region18: #{run_pass.1} parent=0 // pred_check
    _
  $region19: #{run_pass.1} parent=0 // pred_check_branch
    %908 = sbr.rel (0) target = $region21
  $region20: #{run_pass.1} parent=0 // pred_region
    _
  $region21: #{run_pass.1} parent=0 // pred_fallthru
    _
  // Predicated region
  $region22: #{run_pass.1} parent=0 // pred_check
    _
  $region23: #{run_pass.1} parent=0 // pred_check_branch
    %910 = sbr.rel (0) target = $region25
  $region24: #{run_pass.1} parent=0 // pred_region
    _
  $region25: #{run_pass.1} parent=0 // pred_fallthru
    _
  // Predicated region
  $region26: #{run_pass.1} parent=0 // pred_check
    _
  $region27: #{run_pass.1} parent=0 // pred_check_branch
    %912 = sbr.rel (0) target = $region29
  $region28: #{run_pass.1} parent=0 // pred_region
    _
  $region29: #{run_pass.1} parent=0 // pred_fallthru
    _
  // Predicated region
  $region30: #{run_pass.1} parent=0 // pred_check
    _
  $region31: #{run_pass.1} parent=0 // pred_check_branch
    %914 = sbr.rel (0) target = $region33
  $region32: #{run_pass.1} parent=0 // pred_region
    _
  $region33: #{run_pass.1} parent=0 // pred_fallthru
    _

</llo_original>
